<compile_context>
chip_gen: v7x
topology: tpu7x:2x2x1
jax: 0.10.0
libtpu: 0.0.40
codegen_flags: <defaults>
</compile_context>

<pallas_src>
import jax
import jax.numpy as jnp
from jax.experimental import pallas as pl
from jax.experimental.pallas import tpu as pltpu


# ----------------------------- Pallas kernel --------------------------------
def matching_dense_kernel(
    x_ref,        # [B, E]     f32
    gamma_ref,    # [1, E]     f32
    beta_ref,     # [1, E]     f32
    w1_ref,       # [E, 1024]  bf16
    b1_ref,       # [1, 1024]  f32
    w2_ref,       # [1024, 512] bf16
    b2_ref,       # [1, 512]   f32
    w3_ref,       # [512, 64]  bf16
    b3_ref,       # [1, 64]    f32
    o_ref,        # [B, 64]    f32
):
    # BatchNorm1d, training-mode (biased batch variance), eps=1e-5.
    x = x_ref[...]
    mean = jnp.mean(x, axis=0, keepdims=True)
    diff = x - mean
    var = jnp.mean(diff * diff, axis=0, keepdims=True)
    x_bn = diff * jax.lax.rsqrt(var + 1e-5) * gamma_ref[...] + beta_ref[...]

    # d1 + ReLU  (bf16 operands into the MXU, f32 accumulation).
    h1 = jnp.dot(x_bn.astype(jnp.bfloat16), w1_ref[...],
                 preferred_element_type=jnp.float32) + b1_ref[...]
    h1 = jnp.maximum(h1, 0.0).astype(jnp.bfloat16)

    # d2 + ReLU.
    h2 = jnp.dot(h1, w2_ref[...],
                 preferred_element_type=jnp.float32) + b2_ref[...]
    h2 = jnp.maximum(h2, 0.0).astype(jnp.bfloat16)

    # d3 (+ bias) -> output.
    o_ref[...] = (jnp.dot(h2, w3_ref[...],
                          preferred_element_type=jnp.float32)
                  + b3_ref[...]).astype(o_ref.dtype)


@jax.jit
def matching_dense(x, gamma, beta, w1, b1, w2, b2, w3, b3):
    B, E = x.shape
    H1 = w1.shape[1]          # 1024
    H2 = w2.shape[1]          # 512
    OUT = w3.shape[1]         # 64

    # bf16 weights: halves weight HBM->VMEM bytes; no-op if already bf16
    # (weights are pre-cast once outside jit in __main__).
    w1b = w1.astype(jnp.bfloat16)
    w2b = w2.astype(jnp.bfloat16)
    w3b = w3.astype(jnp.bfloat16)

    vmem = pl.BlockSpec(memory_space=pltpu.MemorySpace.VMEM)

    flops = 2 * B * (E * H1 + H1 * H2 + H2 * OUT)
    bytes_accessed = (
        x.size * 4 + gamma.size * 4 + beta.size * 4
        + (w1b.size + w2b.size + w3b.size) * 2
        + (b1.size + b2.size + b3.size) * 4
        + B * OUT * 4
    )

    return pl.pallas_call(
        matching_dense_kernel,
        out_shape=jax.ShapeDtypeStruct((B, OUT), jnp.float32),
        in_specs=[vmem] * 9,
        out_specs=vmem,
        cost_estimate=pl.CostEstimate(
            flops=flops, transcendentals=0, bytes_accessed=bytes_accessed),
        compiler_params=pltpu.CompilerParams(
            vmem_limit_bytes=32 * 1024 * 1024),
    )(x, gamma, beta, w1b, b1, w2b, b2, w3b, b3)


# ----------------------- Pure-JAX reference (for checking) ------------------
def matching_dense_ref(x, gamma, beta, w1, b1, w2, b2, w3, b3):
    mean = jnp.mean(x, axis=0, keepdims=True)
    var = jnp.mean((x - mean) ** 2, axis=0, keepdims=True)
    x_bn = (x - mean) * jax.lax.rsqrt(var + 1e-5) * gamma + beta
    # mirror the kernel's bf16-weight / bf16-activation, f32-accumulate path
    h1 = jnp.maximum(
        jnp.dot(x_bn.astype(jnp.bfloat16), w1.astype(jnp.bfloat16),
                preferred_element_type=jnp.float32) + b1, 0.0)
    h2 = jnp.maximum(
        jnp.dot(h1.astype(jnp.bfloat16), w2.astype(jnp.bfloat16),
                preferred_element_type=jnp.float32) + b2, 0.0)
    return jnp.dot(h2.astype(jnp.bfloat16), w3.astype(jnp.bfloat16),
                   preferred_element_type=jnp.float32) + b3


# ------------------- Synthetic sparse embedding (plain JAX glue) ------------
# TODO(synk): ps.EmbeddingSumConcat / FTRLTensorUpdater is a parameter-server
# sparse layer with no Pallas equivalent; simulated here as lookup-sum-concat.
def embedding_sum_concat(ids, emb_table, feature_count, emb_size):
    gathered = jnp.take(emb_table, ids, axis=0)                    # [B, F, I, emb]
    summed = jnp.sum(gathered, axis=2)                             # [B, F, emb]
    return summed.reshape(ids.shape[0], feature_count * emb_size)  # [B, F*emb]


# ------------------------------- Main ----------------------------------------
if __name__ == "__main__":
    key = jax.random.PRNGKey(0)

    # Small shapes consistent with MatchingDense(emb_out_size=64).
    emb_size = 16
    feature_count = 4
    emb_out_size = feature_count * emb_size   # 64
    batch = 8
    ids_per_feature = 3
    vocab = 100

    keys = jax.random.split(key, 10)

    # Sparse side (glue): produces the dense [B, 64] input to MatchingDense.
    emb_table = 0.01 * jax.random.normal(keys[0], (vocab, emb_size), jnp.float32)
    ids = jax.random.randint(keys[1], (batch, feature_count, ids_per_feature), 0, vocab)

    # Dense-side params. BatchNorm1d defaults: weight=1, bias=0.
    gamma = jnp.ones((1, emb_out_size), jnp.float32)
    beta = jnp.zeros((1, emb_out_size), jnp.float32)

    def linear_init(k, fan_in, fan_out):
        bound = 1.0 / jnp.sqrt(fan_in)
        kw, kb = jax.random.split(k)
        w = jax.random.uniform(kw, (fan_in, fan_out), jnp.float32, -bound, bound)
        b = jax.random.uniform(kb, (1, fan_out), jnp.float32, -bound, bound)
        return w, b

    w1, b1 = linear_init(keys[2], emb_out_size, 1024)
    w2, b2 = linear_init(keys[3], 1024, 512)
    w3, b3 = linear_init(keys[4], 512, 64)

    # Pre-cast weights to bf16 once (setup time) so the per-call cast is a
    # no-op and no extra HBM pass happens on the hot path.
    w1b = w1.astype(jnp.bfloat16)
    w2b = w2.astype(jnp.bfloat16)
    w3b = w3.astype(jnp.bfloat16)

    x_dense = embedding_sum_concat(ids, emb_table, feature_count, emb_size)

    out = matching_dense(x_dense, gamma, beta, w1b, b1, w2b, b2, w3b, b3)
    out = jax.block_until_ready(out)

    ref = matching_dense_ref(x_dense, gamma, beta, w1, b1, w2, b2, w3, b3)

    assert out.shape == (batch, 64), out.shape
    assert jnp.all(jnp.isfinite(out))
    # Tolerance documents the bf16-weight/activation path (f32 accumulation).
    assert jnp.allclose(out, ref, atol=5e-2, rtol=5e-2)
    print("KERNEL_OK")
</pallas_src>

<mosaic_0001>
module attributes {stable_mosaic.version = 11 : i64} {
  func.func @matching_dense_kernel(%arg0: memref<8x64xf32, #tpu.memory_space<vmem>>, %arg1: memref<1x64xf32, #tpu.memory_space<vmem>>, %arg2: memref<1x64xf32, #tpu.memory_space<vmem>>, %arg3: memref<64x1024xbf16, #tpu.memory_space<vmem>>, %arg4: memref<1x1024xf32, #tpu.memory_space<vmem>>, %arg5: memref<1024x512xbf16, #tpu.memory_space<vmem>>, %arg6: memref<1x512xf32, #tpu.memory_space<vmem>>, %arg7: memref<512x64xbf16, #tpu.memory_space<vmem>>, %arg8: memref<1x64xf32, #tpu.memory_space<vmem>>, %arg9: memref<8x64xf32, #tpu.memory_space<vmem>>) attributes {dimension_semantics = [], scalar_prefetch = 0 : i64, scratch_operands = 0 : i64, tpu.core_type = #tpu.core_type<tc>} {
    %c0 = arith.constant 0 : index
    %c0_0 = arith.constant 0 : index
    %0 = vector.load %arg0[%c0, %c0_0] : memref<8x64xf32, #tpu.memory_space<vmem>>, vector<8x64xf32>
    %cst = arith.constant dense<0.000000e+00> : vector<64xf32>
    %1 = vector.multi_reduction <add>, %0, %cst [0] : vector<8x64xf32> to vector<64xf32>
    %2 = vector.shape_cast %1 : vector<64xf32> to vector<1x64xf32>
    %cst_1 = arith.constant 8.000000e+00 : f32
    %3 = vector.broadcast %cst_1 : f32 to vector<1x64xf32>
    %4 = arith.divf %2, %3 : vector<1x64xf32>
    %5 = vector.broadcast %4 : vector<1x64xf32> to vector<8x64xf32>
    %6 = arith.subf %0, %5 : vector<8x64xf32>
    %7 = arith.mulf %6, %6 : vector<8x64xf32>
    %cst_2 = arith.constant dense<0.000000e+00> : vector<64xf32>
    %8 = vector.multi_reduction <add>, %7, %cst_2 [0] : vector<8x64xf32> to vector<64xf32>
    %9 = vector.shape_cast %8 : vector<64xf32> to vector<1x64xf32>
    %cst_3 = arith.constant 8.000000e+00 : f32
    %10 = vector.broadcast %cst_3 : f32 to vector<1x64xf32>
    %11 = arith.divf %9, %10 : vector<1x64xf32>
    %cst_4 = arith.constant 9.99999974E-6 : f32
    %12 = vector.broadcast %cst_4 : f32 to vector<1x64xf32>
    %13 = arith.addf %11, %12 : vector<1x64xf32>
    %14 = math.rsqrt %13 : vector<1x64xf32>
    %15 = vector.broadcast %14 : vector<1x64xf32> to vector<8x64xf32>
    %16 = arith.mulf %6, %15 : vector<8x64xf32>
    %c0_5 = arith.constant 0 : index
    %c0_6 = arith.constant 0 : index
    %17 = vector.load %arg1[%c0_5, %c0_6] : memref<1x64xf32, #tpu.memory_space<vmem>>, vector<1x64xf32>
    %18 = vector.broadcast %17 : vector<1x64xf32> to vector<8x64xf32>
    %19 = arith.mulf %16, %18 : vector<8x64xf32>
    %c0_7 = arith.constant 0 : index
    %c0_8 = arith.constant 0 : index
    %20 = vector.load %arg2[%c0_7, %c0_8] : memref<1x64xf32, #tpu.memory_space<vmem>>, vector<1x64xf32>
    %21 = vector.broadcast %20 : vector<1x64xf32> to vector<8x64xf32>
    %22 = arith.addf %19, %21 : vector<8x64xf32>
    %23 = arith.truncf %22 : vector<8x64xf32> to vector<8x64xbf16>
    %c0_9 = arith.constant 0 : index
    %c0_10 = arith.constant 0 : index
    %24 = vector.load %arg3[%c0_9, %c0_10] : memref<64x1024xbf16, #tpu.memory_space<vmem>>, vector<64x1024xbf16>
    %cst_11 = arith.constant dense<0.000000e+00> : vector<8x1024xf32>
    %25 = tpu.matmul %23, %24, %cst_11 {dimension_numbers = #tpu.dot_dimension_numbers<[1], [0], [0], [1], [0, 0, 1, 1], [], []>} : vector<8x64xbf16>, vector<64x1024xbf16>, vector<8x1024xf32> -> vector<8x1024xf32>
    %c0_12 = arith.constant 0 : index
    %c0_13 = arith.constant 0 : index
    %26 = vector.load %arg4[%c0_12, %c0_13] : memref<1x1024xf32, #tpu.memory_space<vmem>>, vector<1x1024xf32>
    %27 = vector.broadcast %26 : vector<1x1024xf32> to vector<8x1024xf32>
    %28 = arith.addf %25, %27 : vector<8x1024xf32>
    %cst_14 = arith.constant 0.000000e+00 : f32
    %29 = vector.broadcast %cst_14 : f32 to vector<8x1024xf32>
    %30 = arith.maximumf %28, %29 : vector<8x1024xf32>
    %31 = arith.truncf %30 : vector<8x1024xf32> to vector<8x1024xbf16>
    %c0_15 = arith.constant 0 : index
    %c0_16 = arith.constant 0 : index
    %32 = vector.load %arg5[%c0_15, %c0_16] : memref<1024x512xbf16, #tpu.memory_space<vmem>>, vector<1024x512xbf16>
    %cst_17 = arith.constant dense<0.000000e+00> : vector<8x512xf32>
    %33 = tpu.matmul %31, %32, %cst_17 {dimension_numbers = #tpu.dot_dimension_numbers<[1], [0], [0], [1], [0, 0, 1, 1], [], []>} : vector<8x1024xbf16>, vector<1024x512xbf16>, vector<8x512xf32> -> vector<8x512xf32>
    %c0_18 = arith.constant 0 : index
    %c0_19 = arith.constant 0 : index
    %34 = vector.load %arg6[%c0_18, %c0_19] : memref<1x512xf32, #tpu.memory_space<vmem>>, vector<1x512xf32>
    %35 = vector.broadcast %34 : vector<1x512xf32> to vector<8x512xf32>
    %36 = arith.addf %33, %35 : vector<8x512xf32>
    %cst_20 = arith.constant 0.000000e+00 : f32
    %37 = vector.broadcast %cst_20 : f32 to vector<8x512xf32>
    %38 = arith.maximumf %36, %37 : vector<8x512xf32>
    %39 = arith.truncf %38 : vector<8x512xf32> to vector<8x512xbf16>
    %c0_21 = arith.constant 0 : index
    %c0_22 = arith.constant 0 : index
    %40 = vector.load %arg7[%c0_21, %c0_22] : memref<512x64xbf16, #tpu.memory_space<vmem>>, vector<512x64xbf16>
    %cst_23 = arith.constant dense<0.000000e+00> : vector<8x64xf32>
    %41 = tpu.matmul %39, %40, %cst_23 {dimension_numbers = #tpu.dot_dimension_numbers<[1], [0], [0], [1], [0, 0, 1, 1], [], []>} : vector<8x512xbf16>, vector<512x64xbf16>, vector<8x64xf32> -> vector<8x64xf32>
    %c0_24 = arith.constant 0 : index
    %c0_25 = arith.constant 0 : index
    %42 = vector.load %arg8[%c0_24, %c0_25] : memref<1x64xf32, #tpu.memory_space<vmem>>, vector<1x64xf32>
    %43 = vector.broadcast %42 : vector<1x64xf32> to vector<8x64xf32>
    %44 = arith.addf %41, %43 : vector<8x64xf32>
    %c0_26 = arith.constant 0 : index
    %c0_27 = arith.constant 0 : index
    %45 = vector.load %arg9[%c0_26, %c0_27] : memref<8x64xf32, #tpu.memory_space<vmem>>, vector<8x64xf32>
    tpu.vector_store %arg9[%c0_26, %c0_27], %44 {strides = array<i32>} : memref<8x64xf32, #tpu.memory_space<vmem>>, vector<8x64xf32>,
    return
  }
}

</mosaic_0001>

<llo_original>
// kernel: matching_dense.1
$region0: #{matching_dense.1}
  #allocation0 [shape = 'u32[]', space=smem, size = 0x4, offset = 0x4, fixed_abs, tag = 'smem constant byte address 0x4 - core index']
  #allocation1 [shape = 'u32[144,128]{1,0:T(1,128)}', space=vmem, size = 0x12000, scoped, tag = 'internal scratch']
  %s0 = inlined_call_operand.vmem [shape: f32[8,64], index: 0, kind: input, shape index: {}]
  %s1 = inlined_call_operand.vmem [shape: f32[1,64], index: 1, kind: input, shape index: {}]
  %s2 = inlined_call_operand.vmem [shape: f32[1,64], index: 2, kind: input, shape index: {}]
  %s3 = inlined_call_operand.vmem [shape: bf16[64,1024], index: 3, kind: input, shape index: {}]
  %s4 = inlined_call_operand.vmem [shape: f32[1,1024], index: 4, kind: input, shape index: {}]
  %s5 = inlined_call_operand.hbm [shape: bf16[1024,512], index: 5, kind: input, shape index: {}]
  %s6 = inlined_call_operand.vmem [shape: f32[1,512], index: 6, kind: input, shape index: {}]
  %s7 = inlined_call_operand.vmem [shape: bf16[512,64], index: 7, kind: input, shape index: {}]
  %s8 = inlined_call_operand.vmem [shape: f32[1,64], index: 8, kind: input, shape index: {}]
  %s9 = inlined_call_operand.hbm [shape: f32[8,64], index: 9, kind: output, shape index: {}]
  %s10 = sld [smem:[#allocation0]]
  $region50: #{matching_dense.1} parent=0
    _
  %s12 = ssub.s32 1, %s10
  %s13 = scalar_select 0, %s12, %s10
  $region1: #{matching_dense.1} parent=0
    #allocation2 [shape = 'u8[1048576]{0}', space=vmem, size = 0x100000, scoped, tag = 'input window, operand 5, single buffered']
    #allocation3 [shape = 's32[1]{0}', space=sflag, size = 0x4, scoped, tag = 'scoped memory for matching_dense.1']
    #allocation4 [shape = 's32[1]{0}', space=sflag, size = 0x4, scoped, tag = 'scoped memory for matching_dense.1']
    #allocation5 [shape = 'u8[4096]{0}', space=vmem, size = 0x1000, scoped, tag = 'output window, operand 0, single buffered']
    %14 = vsyncpa [#allocation3], 0
    %15 = vsyncpa [#allocation4], 0
    // Predicated region
    $region2: #{matching_dense.1} parent=1 // pred_check
      _
    $region3: #{matching_dense.1} parent=1 // pred_check_branch
      %17 = sbr.rel (0) target = $region5
    $region4: #{matching_dense.1} parent=1 // pred_region
      _
    $region5: #{matching_dense.1} parent=1 // pred_fallthru
      _
    // Predicated region
    $region6: #{matching_dense.1} parent=1 // pred_check
      _
    $region7: #{matching_dense.1} parent=1 // pred_check_branch
      %19 = sbr.rel (0) target = $region9
    $region8: #{matching_dense.1} parent=1 // pred_region
      _
    $region9: #{matching_dense.1} parent=1 // pred_fallthru
      _
    // Predicated region
    $region10: #{matching_dense.1} parent=1 // pred_check
      _
    $region11: #{matching_dense.1} parent=1 // pred_check_branch
      %21 = sbr.rel (0) target = $region13
    $region12: #{matching_dense.1} parent=1 // pred_region
      _
    $region13: #{matching_dense.1} parent=1 // pred_fallthru
      _
    // Predicated region
    $region14: #{matching_dense.1} parent=1 // pred_check
      _
    $region15: #{matching_dense.1} parent=1 // pred_check_branch
      %23 = sbr.rel (0) target = $region17
    $region16: #{matching_dense.1} parent=1 // pred_region
      _
    $region17: #{matching_dense.1} parent=1 // pred_fallthru
      _
    // Predicated region
    $region18: #{matching_dense.1} parent=1 // pred_check
      _
    $region19: #{matching_dense.1} parent=1 // pred_check_branch
      %25 = sbr.rel (0) target = $region21
    $region20: #{matching_dense.1} parent=1 // pred_region
      _
    $region21: #{matching_dense.1} parent=1 // pred_fallthru
      _
    // Predicated region
    $region22: #{matching_dense.1} parent=1 // pred_check
      _
    $region23: #{matching_dense.1} parent=1 // pred_check_branch
      %27 = sbr.rel (0) target = $region25
    $region24: #{matching_dense.1} parent=1 // pred_region
      %s29 = ssub.s32 32768, 32768
      %30 = vsyncadd [#allocation3], %s29
      %s31 = sshll.u32 [#allocation2], 4
      %s32 = int_to_ptr.vmem [resolvable:$true] %s31
      %37 = dma.hbm_to_vmem [thread:$0]  %s5, 32768, %s32, [#allocation3], 256, 256, 16
    $region25: #{matching_dense.1} parent=1 // pred_fallthru
      _
    // Predicated region
    $region26: #{matching_dense.1} parent=1 // pred_check
      _
    $region27: #{matching_dense.1} parent=1 // pred_check_branch
      %39 = sbr.rel (0) target = $region29
    $region28: #{matching_dense.1} parent=1 // pred_region
      _
    $region29: #{matching_dense.1} parent=1 // pred_fallthru
      _
    // Predicated region
    $region30: #{matching_dense.1} parent=1 // pred_check
      _
    $region31: #{matching_dense.1} parent=1 // pred_check_branch
      %41 = sbr.rel (0) target = $region33
    $region32: #{matching_dense.1} parent=1 // pred_region
      _
    $region33: #{matching_dense.1} parent=1 // pred_fallthru
      _
    // Predicated region
    $region34: #{matching_dense.1} parent=1 // pred_check
      _
    $region35: #{matching_dense.1} parent=1 // pred_check_branch
      %43 = sbr.rel (0) target = $region37
    $region36: #{matching_dense.1} parent=1 // pred_region
      _
    $region37: #{matching_dense.1} parent=1 // pred_fallthru
      _
    // Predicated region
    $region38: #{matching_dense.1} parent=1 // pred_check
      _
    $region39: #{matching_dense.1} parent=1 // pred_check_branch
      %45 = sbr.rel (0) target = $region41
    $region40: #{matching_dense.1} parent=1 // pred_region
      %46 = dma.done [#allocation3], 32768
    $region41: #{matching_dense.1} parent=1 // pred_fallthru
      _
    %v48 = vld [vmem:[%s0] sm:$0xff]
    %vm49 = vcmask 523264
    %v50 = vsel %vm49, %v48, 0.0
    %v51 = vrot.slane %v50, 4
    %v52 = vadd.f32 %v50, %v51
    %v53 = vrot.slane %v52, 2
    %v54 = vadd.f32 %v52, %v53
    %v55 = vrot.slane %v54, 1
    %v56 = vadd.f32 %v54, %v55
    %v57 = vrcp.pop 8.0
    %v58 = vmul.f32 %v56, %v57
    %v59 = vsub.f32 %v48, %v58
    %v60 = vmul.f32 %v59, %v59
    %v61 = vsel %vm49, %v60, 0.0
    %v62 = vrot.slane %v61, 4
    %v63 = vadd.f32 %v61, %v62
    %v64 = vrot.slane %v63, 2
    %v65 = vadd.f32 %v63, %v64
    %v66 = vrot.slane %v65, 1
    %v67 = vadd.f32 %v65, %v66
    %v68 = vmul.f32 %v67, %v57
    %v69 = vadd.f32 %v68, 1e-05
    %v70 = vrsqrt.pop %v69
    %v71 = vmul.f32 %v59, %v70
    %v72 = vld [vmem:[%s1] sm:$0x1]
    %v74 = vlaneseq
    %v75 = vshrl.u32 %v74, 7
    %v76 = vsub.s32 0, %v75
    %v77 = vrot.slane %v72, %v76
    %v79 = vmul.f32 %v71, %v77
    %v80 = vld [vmem:[%s2] sm:$0x1]
    %v82 = vlaneseq
    %v83 = vshrl.u32 %v82, 7
    %v84 = vsub.s32 0, %v83
    %v85 = vrot.slane %v80, %v84
    %v87 = vadd.f32 %v79, %v85
    %v88 = vpack.c.bf16 %v87, %v87
    %v89 = vld [vmem:[%s3] sm:$0xff]
    %v90 = vld [vmem:[%s3 + $0x8] sm:$0xff]
    %v91 = vld [vmem:[%s3 + $0x10] sm:$0xff]
    %v92 = vld [vmem:[%s3 + $0x18] sm:$0xff]
    %v93 = vld [vmem:[%s3 + $0x20] sm:$0xff]
    %v94 = vld [vmem:[%s3 + $0x28] sm:$0xff]
    %v95 = vld [vmem:[%s3 + $0x30] sm:$0xff]
    %v96 = vld [vmem:[%s3 + $0x38] sm:$0xff]
    %v97 = vld [vmem:[%s3 + $0x40] sm:$0xff]
    %v98 = vld [vmem:[%s3 + $0x48] sm:$0xff]
    %v99 = vld [vmem:[%s3 + $0x50] sm:$0xff]
    %v100 = vld [vmem:[%s3 + $0x58] sm:$0xff]
    %v101 = vld [vmem:[%s3 + $0x60] sm:$0xff]
    %v102 = vld [vmem:[%s3 + $0x68] sm:$0xff]
    %v103 = vld [vmem:[%s3 + $0x70] sm:$0xff]
    %v104 = vld [vmem:[%s3 + $0x78] sm:$0xff]
    %v105 = vld [vmem:[%s3 + $0x80] sm:$0xff]
    %v106 = vld [vmem:[%s3 + $0x88] sm:$0xff]
    %v107 = vld [vmem:[%s3 + $0x90] sm:$0xff]
    %v108 = vld [vmem:[%s3 + $0x98] sm:$0xff]
    %v109 = vld [vmem:[%s3 + $0xa0] sm:$0xff]
    %v110 = vld [vmem:[%s3 + $0xa8] sm:$0xff]
    %v111 = vld [vmem:[%s3 + $0xb0] sm:$0xff]
    %v112 = vld [vmem:[%s3 + $0xb8] sm:$0xff]
    %v113 = vld [vmem:[%s3 + $0xc0] sm:$0xff]
    %v114 = vld [vmem:[%s3 + $0xc8] sm:$0xff]
    %v115 = vld [vmem:[%s3 + $0xd0] sm:$0xff]
    %v116 = vld [vmem:[%s3 + $0xd8] sm:$0xff]
    %v117 = vld [vmem:[%s3 + $0xe0] sm:$0xff]
    %v118 = vld [vmem:[%s3 + $0xe8] sm:$0xff]
    %v119 = vld [vmem:[%s3 + $0xf0] sm:$0xff]
    %v120 = vld [vmem:[%s3 + $0xf8] sm:$0xff]
    %v121 = vld [vmem:[%s4] sm:$0xff]
    %v123 = vlaneseq
    %v124 = vshrl.u32 %v123, 7
    %v125 = vsub.s32 0, %v124
    %v126 = vrot.slane %v121, %v125
    %v127 = vlaneseq
    %v128 = vshrl.u32 %v127, 7
    %v129 = vsub.s32 1, %v128
    %v130 = vrot.slane %v121, %v129
    %v131 = vlaneseq
    %v132 = vshrl.u32 %v131, 7
    %v133 = vsub.s32 2, %v132
    %v134 = vrot.slane %v121, %v133
    %v135 = vlaneseq
    %v136 = vshrl.u32 %v135, 7
    %v137 = vsub.s32 3, %v136
    %v138 = vrot.slane %v121, %v137
    %v139 = vlaneseq
    %v140 = vshrl.u32 %v139, 7
    %v141 = vsub.s32 4, %v140
    %v142 = vrot.slane %v121, %v141
    %v143 = vlaneseq
    %v144 = vshrl.u32 %v143, 7
    %v145 = vsub.s32 5, %v144
    %v146 = vrot.slane %v121, %v145
    %v147 = vlaneseq
    %v148 = vshrl.u32 %v147, 7
    %v149 = vsub.s32 6, %v148
    %v150 = vrot.slane %v121, %v149
    %v151 = vlaneseq
    %v152 = vshrl.u32 %v151, 7
    %v153 = vsub.s32 7, %v152
    %v154 = vrot.slane %v121, %v153
    %v195 = vunpack.c.l.b16 %v89
    %v196 = vunpack.c.h.b16 %v89
    %v197 = vunpack.c.l.b16 %v90
    %v198 = vunpack.c.h.b16 %v90
    %v199 = vunpack.c.l.b16 %v91
    %v200 = vunpack.c.h.b16 %v91
    %v201 = vunpack.c.l.b16 %v92
    %v202 = vunpack.c.h.b16 %v92
    %v203 = vunpack.c.l.b16 %v93
    %v204 = vunpack.c.h.b16 %v93
    %v205 = vunpack.c.l.b16 %v94
    %v206 = vunpack.c.h.b16 %v94
    %v207 = vunpack.c.l.b16 %v95
    %v208 = vunpack.c.h.b16 %v95
    %v209 = vunpack.c.l.b16 %v96
    %v210 = vunpack.c.h.b16 %v96
    %v211 = vunpack.c.l.b16 %v97
    %v212 = vunpack.c.h.b16 %v97
    %v213 = vunpack.c.l.b16 %v98
    %v214 = vunpack.c.h.b16 %v98
    %v215 = vunpack.c.l.b16 %v99
    %v216 = vunpack.c.h.b16 %v99
    %v217 = vunpack.c.l.b16 %v100
    %v218 = vunpack.c.h.b16 %v100
    %v219 = vunpack.c.l.b16 %v101
    %v220 = vunpack.c.h.b16 %v101
    %v221 = vunpack.c.l.b16 %v102
    %v222 = vunpack.c.h.b16 %v102
    %v223 = vunpack.c.l.b16 %v103
    %v224 = vunpack.c.h.b16 %v103
    %v225 = vunpack.c.l.b16 %v104
    %v226 = vunpack.c.h.b16 %v104
    %v227 = vunpack.c.l.b16 %v105
    %v228 = vunpack.c.h.b16 %v105
    %v229 = vunpack.c.l.b16 %v106
    %v230 = vunpack.c.h.b16 %v106
    %v231 = vunpack.c.l.b16 %v107
    %v232 = vunpack.c.h.b16 %v107
    %v233 = vunpack.c.l.b16 %v108
    %v234 = vunpack.c.h.b16 %v108
    %v235 = vunpack.c.l.b16 %v109
    %v236 = vunpack.c.h.b16 %v109
    %v237 = vunpack.c.l.b16 %v110
    %v238 = vunpack.c.h.b16 %v110
    %v239 = vunpack.c.l.b16 %v111
    %v240 = vunpack.c.h.b16 %v111
    %v241 = vunpack.c.l.b16 %v112
    %v242 = vunpack.c.h.b16 %v112
    %v243 = vunpack.c.l.b16 %v113
    %v244 = vunpack.c.h.b16 %v113
    %v245 = vunpack.c.l.b16 %v114
    %v246 = vunpack.c.h.b16 %v114
    %v247 = vunpack.c.l.b16 %v115
    %v248 = vunpack.c.h.b16 %v115
    %v249 = vunpack.c.l.b16 %v116
    %v250 = vunpack.c.h.b16 %v116
    %v251 = vunpack.c.l.b16 %v117
    %v252 = vunpack.c.h.b16 %v117
    %v253 = vunpack.c.l.b16 %v118
    %v254 = vunpack.c.h.b16 %v118
    %v255 = vunpack.c.l.b16 %v119
    %v256 = vunpack.c.h.b16 %v119
    %v257 = vunpack.c.l.b16 %v120
    %v258 = vunpack.c.h.b16 %v120
    %v259 = vpack.c.b16 %v203, %v195
    %v260 = vpack.c.b16 %v204, %v196
    %v261 = vpack.c.b16 %v205, %v197
    %v262 = vpack.c.b16 %v206, %v198
    %v263 = vpack.c.b16 %v207, %v199
    %v264 = vpack.c.b16 %v208, %v200
    %v265 = vpack.c.b16 %v209, %v201
    %v266 = vpack.c.b16 %v210, %v202
    %v267 = vpack.c.b16 %v219, %v211
    %v268 = vpack.c.b16 %v220, %v212
    %v269 = vpack.c.b16 %v221, %v213
    %v270 = vpack.c.b16 %v222, %v214
    %v271 = vpack.c.b16 %v223, %v215
    %v272 = vpack.c.b16 %v224, %v216
    %v273 = vpack.c.b16 %v225, %v217
    %v274 = vpack.c.b16 %v226, %v218
    %v275 = vpack.c.b16 %v235, %v227
    %v276 = vpack.c.b16 %v236, %v228
    %v277 = vpack.c.b16 %v237, %v229
    %v278 = vpack.c.b16 %v238, %v230
    %v279 = vpack.c.b16 %v239, %v231
    %v280 = vpack.c.b16 %v240, %v232
    %v281 = vpack.c.b16 %v241, %v233
    %v282 = vpack.c.b16 %v242, %v234
    %v283 = vpack.c.b16 %v251, %v243
    %v284 = vpack.c.b16 %v252, %v244
    %v285 = vpack.c.b16 %v253, %v245
    %v286 = vpack.c.b16 %v254, %v246
    %v287 = vpack.c.b16 %v255, %v247
    %v288 = vpack.c.b16 %v256, %v248
    %v289 = vpack.c.b16 %v257, %v249
    %v290 = vpack.c.b16 %v258, %v250
    %v324 = vsel %vm49, %v88, 0
    %326 = vmatprep.subr.bf16.mxu0 %v260
    %327 = vmatpush1.bf16.msra.mxu0 %v259
    %328 = vmatprep.subr.bf16.mxu0 %v268
    %329 = vmatpush1.bf16.msra.mxu0 %v267
    %330 = vmatprep.subr.bf16.mxu0 %v276
    %331 = vmatpush1.bf16.msra.mxu0 %v275
    %332 = vmatprep.subr.bf16.mxu0 %v284
    %333 = vmatpush1.bf16.msra.mxu0 %v283
    %334 = vmatprep.subr.bf16.mxu0 0
    %335 = vmatpush1.bf16.msra.mxu0 0
    %336 = vmatprep.subr.bf16.mxu0 0
    %337 = vmatpush1.bf16.msra.mxu0 0
    %338 = vmatprep.subr.bf16.mxu0 0
    %339 = vmatpush1.bf16.msra.mxu0 0
    %340 = vmatprep.subr.bf16.mxu0 0
    %341 = vmatpush1.bf16.msra.mxu0 0
    %342 = vmatprep.subr.bf16.mxu0 0
    %343 = vmatpush1.bf16.msra.mxu0 0
    %344 = vmatprep.subr.bf16.mxu0 0
    %345 = vmatpush1.bf16.msra.mxu0 0
    %346 = vmatprep.subr.bf16.mxu0 0
    %347 = vmatpush1.bf16.msra.mxu0 0
    %348 = vmatprep.subr.bf16.mxu0 0
    %349 = vmatpush1.bf16.msra.mxu0 0
    %350 = vmatprep.subr.bf16.mxu0 0
    %351 = vmatpush1.bf16.msra.mxu0 0
    %352 = vmatprep.subr.bf16.mxu0 0
    %353 = vmatpush1.bf16.msra.mxu0 0
    %354 = vmatprep.subr.bf16.mxu0 0
    %355 = vmatpush1.bf16.msra.mxu0 0
    %356 = vmatprep.subr.bf16.mxu0 0
    %357 = vmatpush1.bf16.msra.mxu0 0
    %358 = vmatprep.mubr.bf16.mxu0 0
    %359 = vmatmul.mubr.bf16.gmra.mrb[0].mxu0 %v324
    %v360 = vpop.f32.mrb[0].mxu0
    %v361 = vadd.f32 %v126, %v360
    %v362 = vpop.f32.mrb[0].mxu0
    %v363 = vadd.f32 %v130, %v362
    %v364 = vpop.f32.mrb[0].mxu0
    %v365 = vpop.f32.mrb[0].mxu0
    %366 = vdwg.mxu0
    %367 = vmatprep.subr.bf16.mxu0 %v262
    %368 = vmatpush1.bf16.msra.mxu0 %v261
    %369 = vmatprep.subr.bf16.mxu0 %v270
    %370 = vmatpush1.bf16.msra.mxu0 %v269
    %371 = vmatprep.subr.bf16.mxu0 %v278
    %372 = vmatpush1.bf16.msra.mxu0 %v277
    %373 = vmatprep.subr.bf16.mxu0 %v286
    %374 = vmatpush1.bf16.msra.mxu0 %v285
    %375 = vmatprep.subr.bf16.mxu0 0
    %376 = vmatpush1.bf16.msra.mxu0 0
    %377 = vmatprep.subr.bf16.mxu0 0
    %378 = vmatpush1.bf16.msra.mxu0 0
    %379 = vmatprep.subr.bf16.mxu0 0
    %380 = vmatpush1.bf16.msra.mxu0 0
    %381 = vmatprep.subr.bf16.mxu0 0
    %382 = vmatpush1.bf16.msra.mxu0 0
    %383 = vmatprep.subr.bf16.mxu0 0
    %384 = vmatpush1.bf16.msra.mxu0 0
    %385 = vmatprep.subr.bf16.mxu0 0
    %386 = vmatpush1.bf16.msra.mxu0 0
    %387 = vmatprep.subr.bf16.mxu0 0
    %388 = vmatpush1.bf16.msra.mxu0 0
    %389 = vmatprep.subr.bf16.mxu0 0
    %390 = vmatpush1.bf16.msra.mxu0 0
    %391 = vmatprep.subr.bf16.mxu0 0
    %392 = vmatpush1.bf16.msra.mxu0 0
    %393 = vmatprep.subr.bf16.mxu0 0
    %394 = vmatpush1.bf16.msra.mxu0 0
    %395 = vmatprep.subr.bf16.mxu0 0
    %396 = vmatpush1.bf16.msra.mxu0 0
    %397 = vmatprep.subr.bf16.mxu0 0
    %398 = vmatpush1.bf16.msra.mxu0 0
    %399 = vmatprep.mubr.bf16.mxu0 0
    %400 = vmatmul.mubr.bf16.gmra.mrb[0].mxu0 %v324
    %v401 = vpop.f32.mrb[0].mxu0
    %v402 = vadd.f32 %v134, %v401
    %v403 = vpop.f32.mrb[0].mxu0
    %v404 = vadd.f32 %v138, %v403
    %v405 = vpop.f32.mrb[0].mxu0
    %v406 = vpop.f32.mrb[0].mxu0
    %407 = vdwg.mxu0
    %408 = vmatprep.subr.bf16.mxu0 %v264
    %409 = vmatpush1.bf16.msra.mxu0 %v263
    %410 = vmatprep.subr.bf16.mxu0 %v272
    %411 = vmatpush1.bf16.msra.mxu0 %v271
    %412 = vmatprep.subr.bf16.mxu0 %v280
    %413 = vmatpush1.bf16.msra.mxu0 %v279
    %414 = vmatprep.subr.bf16.mxu0 %v288
    %415 = vmatpush1.bf16.msra.mxu0 %v287
    %416 = vmatprep.subr.bf16.mxu0 0
    %417 = vmatpush1.bf16.msra.mxu0 0
    %418 = vmatprep.subr.bf16.mxu0 0
    %419 = vmatpush1.bf16.msra.mxu0 0
    %420 = vmatprep.subr.bf16.mxu0 0
    %421 = vmatpush1.bf16.msra.mxu0 0
    %422 = vmatprep.subr.bf16.mxu0 0
    %423 = vmatpush1.bf16.msra.mxu0 0
    %424 = vmatprep.subr.bf16.mxu0 0
    %425 = vmatpush1.bf16.msra.mxu0 0
    %426 = vmatprep.subr.bf16.mxu0 0
    %427 = vmatpush1.bf16.msra.mxu0 0
    %428 = vmatprep.subr.bf16.mxu0 0
    %429 = vmatpush1.bf16.msra.mxu0 0
    %430 = vmatprep.subr.bf16.mxu0 0
    %431 = vmatpush1.bf16.msra.mxu0 0
    %432 = vmatprep.subr.bf16.mxu0 0
    %433 = vmatpush1.bf16.msra.mxu0 0
    %434 = vmatprep.subr.bf16.mxu0 0
    %435 = vmatpush1.bf16.msra.mxu0 0
    %436 = vmatprep.subr.bf16.mxu0 0
    %437 = vmatpush1.bf16.msra.mxu0 0
    %438 = vmatprep.subr.bf16.mxu0 0
    %439 = vmatpush1.bf16.msra.mxu0 0
    %440 = vmatprep.mubr.bf16.mxu0 0
    %441 = vmatmul.mubr.bf16.gmra.mrb[0].mxu0 %v324
    %v442 = vpop.f32.mrb[0].mxu0
    %v443 = vadd.f32 %v142, %v442
    %v444 = vpop.f32.mrb[0].mxu0
    %v445 = vadd.f32 %v146, %v444
    %v446 = vpop.f32.mrb[0].mxu0
    %v447 = vpop.f32.mrb[0].mxu0
    %448 = vdwg.mxu0
    %449 = vmatprep.subr.bf16.mxu0 %v266
    %450 = vmatpush1.bf16.msra.mxu0 %v265
    %451 = vmatprep.subr.bf16.mxu0 %v274
    %452 = vmatpush1.bf16.msra.mxu0 %v273
    %453 = vmatprep.subr.bf16.mxu0 %v282
    %454 = vmatpush1.bf16.msra.mxu0 %v281
    %455 = vmatprep.subr.bf16.mxu0 %v290
    %456 = vmatpush1.bf16.msra.mxu0 %v289
    %457 = vmatprep.subr.bf16.mxu0 0
    %458 = vmatpush1.bf16.msra.mxu0 0
    %459 = vmatprep.subr.bf16.mxu0 0
    %460 = vmatpush1.bf16.msra.mxu0 0
    %461 = vmatprep.subr.bf16.mxu0 0
    %462 = vmatpush1.bf16.msra.mxu0 0
    %463 = vmatprep.subr.bf16.mxu0 0
    %464 = vmatpush1.bf16.msra.mxu0 0
    %465 = vmatprep.subr.bf16.mxu0 0
    %466 = vmatpush1.bf16.msra.mxu0 0
    %467 = vmatprep.subr.bf16.mxu0 0
    %468 = vmatpush1.bf16.msra.mxu0 0
    %469 = vmatprep.subr.bf16.mxu0 0
    %470 = vmatpush1.bf16.msra.mxu0 0
    %471 = vmatprep.subr.bf16.mxu0 0
    %472 = vmatpush1.bf16.msra.mxu0 0
    %473 = vmatprep.subr.bf16.mxu0 0
    %474 = vmatpush1.bf16.msra.mxu0 0
    %475 = vmatprep.subr.bf16.mxu0 0
    %476 = vmatpush1.bf16.msra.mxu0 0
    %477 = vmatprep.subr.bf16.mxu0 0
    %478 = vmatpush1.bf16.msra.mxu0 0
    %479 = vmatprep.subr.bf16.mxu0 0
    %480 = vmatpush1.bf16.msra.mxu0 0
    %481 = vmatprep.mubr.bf16.mxu0 0
    %482 = vmatmul.mubr.bf16.gmra.mrb[0].mxu0 %v324
    %v483 = vpop.f32.mrb[0].mxu0
    %v484 = vadd.f32 %v150, %v483
    %v485 = vpop.f32.mrb[0].mxu0
    %v486 = vadd.f32 %v154, %v485
    %v487 = vpop.f32.mrb[0].mxu0
    %v488 = vpop.f32.mrb[0].mxu0
    %489 = vdwg.mxu0
    %v490 = vmax.f32 %v361, 0.0
    %v491 = vmax.f32 %v363, 0.0
    %v492 = vmax.f32 %v402, 0.0
    %v493 = vmax.f32 %v404, 0.0
    %v494 = vmax.f32 %v443, 0.0
    %v495 = vmax.f32 %v445, 0.0
    %v496 = vmax.f32 %v484, 0.0
    %v497 = vmax.f32 %v486, 0.0
    %v498 = vpack.c.bf16 %v490, %v490
    %v499 = vpack.c.bf16 %v491, %v491
    %v500 = vpack.c.bf16 %v492, %v492
    %v501 = vpack.c.bf16 %v493, %v493
    %v502 = vpack.c.bf16 %v494, %v494
    %v503 = vpack.c.bf16 %v495, %v495
    %v504 = vpack.c.bf16 %v496, %v496
    %v505 = vpack.c.bf16 %v497, %v497
    %v506 = vld [vmem:[#allocation2] sm:$0xff]
    %v507 = vld [vmem:[#allocation2 + $0x8] sm:$0xff]
    %v508 = vld [vmem:[#allocation2 + $0x10] sm:$0xff]
    %v509 = vld [vmem:[#allocation2 + $0x18] sm:$0xff]
    %v510 = vld [vmem:[#allocation2 + $0x20] sm:$0xff]
    %v511 = vld [vmem:[#allocation2 + $0x28] sm:$0xff]
    %v512 = vld [vmem:[#allocation2 + $0x30] sm:$0xff]
    %v513 = vld [vmem:[#allocation2 + $0x38] sm:$0xff]
    %v514 = vld [vmem:[#allocation2 + $0x40] sm:$0xff]
    %v515 = vld [vmem:[#allocation2 + $0x48] sm:$0xff]
    %v516 = vld [vmem:[#allocation2 + $0x50] sm:$0xff]
    %v517 = vld [vmem:[#allocation2 + $0x58] sm:$0xff]
    %v518 = vld [vmem:[#allocation2 + $0x60] sm:$0xff]
    %v519 = vld [vmem:[#allocation2 + $0x68] sm:$0xff]
    %v520 = vld [vmem:[#allocation2 + $0x70] sm:$0xff]
    %v521 = vld [vmem:[#allocation2 + $0x78] sm:$0xff]
    %v522 = vld [vmem:[#allocation2 + $0x80] sm:$0xff]
    %v523 = vld [vmem:[#allocation2 + $0x88] sm:$0xff]
    %v524 = vld [vmem:[#allocation2 + $0x90] sm:$0xff]
    %v525 = vld [vmem:[#allocation2 + $0x98] sm:$0xff]
    %v526 = vld [vmem:[#allocation2 + $0xa0] sm:$0xff]
    %v527 = vld [vmem:[#allocation2 + $0xa8] sm:$0xff]
    %v528 = vld [vmem:[#allocation2 + $0xb0] sm:$0xff]
    %v529 = vld [vmem:[#allocation2 + $0xb8] sm:$0xff]
    %v530 = vld [vmem:[#allocation2 + $0xc0] sm:$0xff]
    %v531 = vld [vmem:[#allocation2 + $0xc8] sm:$0xff]
    %v532 = vld [vmem:[#allocation2 + $0xd0] sm:$0xff]
    %v533 = vld [vmem:[#allocation2 + $0xd8] sm:$0xff]
    %v534 = vld [vmem:[#allocation2 + $0xe0] sm:$0xff]
    %v535 = vld [vmem:[#allocation2 + $0xe8] sm:$0xff]
    %v536 = vld [vmem:[#allocation2 + $0xf0] sm:$0xff]
    %v537 = vld [vmem:[#allocation2 + $0xf8] sm:$0xff]
    %v538 = vld [vmem:[#allocation2 + $0x100] sm:$0xff]
    %v539 = vld [vmem:[#allocation2 + $0x108] sm:$0xff]
    %v540 = vld [vmem:[#allocation2 + $0x110] sm:$0xff]
    %v541 = vld [vmem:[#allocation2 + $0x118] sm:$0xff]
    %v542 = vld [vmem:[#allocation2 + $0x120] sm:$0xff]
    %v543 = vld [vmem:[#allocation2 + $0x128] sm:$0xff]
    %v544 = vld [vmem:[#allocation2 + $0x130] sm:$0xff]
    %v545 = vld [vmem:[#allocation2 + $0x138] sm:$0xff]
    %v546 = vld [vmem:[#allocation2 + $0x140] sm:$0xff]
    %v547 = vld [vmem:[#allocation2 + $0x148] sm:$0xff]
    %v548 = vld [vmem:[#allocation2 + $0x150] sm:$0xff]
    %v549 = vld [vmem:[#allocation2 + $0x158] sm:$0xff]
    %v550 = vld [vmem:[#allocation2 + $0x160] sm:$0xff]
    %v551 = vld [vmem:[#allocation2 + $0x168] sm:$0xff]
    %v552 = vld [vmem:[#allocation2 + $0x170] sm:$0xff]
    %v553 = vld [vmem:[#allocation2 + $0x178] sm:$0xff]
    %v554 = vld [vmem:[#allocation2 + $0x180] sm:$0xff]
    %v555 = vld [vmem:[#allocation2 + $0x188] sm:$0xff]
    %v556 = vld [vmem:[#allocation2 + $0x190] sm:$0xff]
    %v557 = vld [vmem:[#allocation2 + $0x198] sm:$0xff]
    %v558 = vld [vmem:[#allocation2 + $0x1a0] sm:$0xff]
    %v559 = vld [vmem:[#allocation2 + $0x1a8] sm:$0xff]
    %v560 = vld [vmem:[#allocation2 + $0x1b0] sm:$0xff]
    %v561 = vld [vmem:[#allocation2 + $0x1b8] sm:$0xff]
    %v562 = vld [vmem:[#allocation2 + $0x1c0] sm:$0xff]
    %v563 = vld [vmem:[#allocation2 + $0x1c8] sm:$0xff]
    %v564 = vld [vmem:[#allocation2 + $0x1d0] sm:$0xff]
    %v565 = vld [vmem:[#allocation2 + $0x1d8] sm:$0xff]
    %v566 = vld [vmem:[#allocation2 + $0x1e0] sm:$0xff]
    %v567 = vld [vmem:[#allocation2 + $0x1e8] sm:$0xff]
    %v568 = vld [vmem:[#allocation2 + $0x1f0] sm:$0xff]
    %v569 = vld [vmem:[#allocation2 + $0x1f8] sm:$0xff]
    %v570 = vld [vmem:[#allocation2 + $0x200] sm:$0xff]
    %v571 = vld [vmem:[#allocation2 + $0x208] sm:$0xff]
    %v572 = vld [vmem:[#allocation2 + $0x210] sm:$0xff]
    %v573 = vld [vmem:[#allocation2 + $0x218] sm:$0xff]
    %v574 = vld [vmem:[#allocation2 + $0x220] sm:$0xff]
    %v575 = vld [vmem:[#allocation2 + $0x228] sm:$0xff]
    %v576 = vld [vmem:[#allocation2 + $0x230] sm:$0xff]
    %v577 = vld [vmem:[#allocation2 + $0x238] sm:$0xff]
    %v578 = vld [vmem:[#allocation2 + $0x240] sm:$0xff]
    %v579 = vld [vmem:[#allocation2 + $0x248] sm:$0xff]
    %v580 = vld [vmem:[#allocation2 + $0x250] sm:$0xff]
    %v581 = vld [vmem:[#allocation2 + $0x258] sm:$0xff]
    %v582 = vld [vmem:[#allocation2 + $0x260] sm:$0xff]
    %v583 = vld [vmem:[#allocation2 + $0x268] sm:$0xff]
    %v584 = vld [vmem:[#allocation2 + $0x270] sm:$0xff]
    %v585 = vld [vmem:[#allocation2 + $0x278] sm:$0xff]
    %v586 = vld [vmem:[#allocation2 + $0x280] sm:$0xff]
    %v587 = vld [vmem:[#allocation2 + $0x288] sm:$0xff]
    %v588 = vld [vmem:[#allocation2 + $0x290] sm:$0xff]
    %v589 = vld [vmem:[#allocation2 + $0x298] sm:$0xff]
    %v590 = vld [vmem:[#allocation2 + $0x2a0] sm:$0xff]
    %v591 = vld [vmem:[#allocation2 + $0x2a8] sm:$0xff]
    %v592 = vld [vmem:[#allocation2 + $0x2b0] sm:$0xff]
    %v593 = vld [vmem:[#allocation2 + $0x2b8] sm:$0xff]
    %v594 = vld [vmem:[#allocation2 + $0x2c0] sm:$0xff]
    %v595 = vld [vmem:[#allocation2 + $0x2c8] sm:$0xff]
    %v596 = vld [vmem:[#allocation2 + $0x2d0] sm:$0xff]
    %v597 = vld [vmem:[#allocation2 + $0x2d8] sm:$0xff]
    %v598 = vld [vmem:[#allocation2 + $0x2e0] sm:$0xff]
    %v599 = vld [vmem:[#allocation2 + $0x2e8] sm:$0xff]
    %v600 = vld [vmem:[#allocation2 + $0x2f0] sm:$0xff]
    %v601 = vld [vmem:[#allocation2 + $0x2f8] sm:$0xff]
    %v602 = vld [vmem:[#allocation2 + $0x300] sm:$0xff]
    %v603 = vld [vmem:[#allocation2 + $0x308] sm:$0xff]
    %v604 = vld [vmem:[#allocation2 + $0x310] sm:$0xff]
    %v605 = vld [vmem:[#allocation2 + $0x318] sm:$0xff]
    %v606 = vld [vmem:[#allocation2 + $0x320] sm:$0xff]
    %v607 = vld [vmem:[#allocation2 + $0x328] sm:$0xff]
    %v608 = vld [vmem:[#allocation2 + $0x330] sm:$0xff]
    %v609 = vld [vmem:[#allocation2 + $0x338] sm:$0xff]
    %v610 = vld [vmem:[#allocation2 + $0x340] sm:$0xff]
    %v611 = vld [vmem:[#allocation2 + $0x348] sm:$0xff]
    %v612 = vld [vmem:[#allocation2 + $0x350] sm:$0xff]
    %v613 = vld [vmem:[#allocation2 + $0x358] sm:$0xff]
    %v614 = vld [vmem:[#allocation2 + $0x360] sm:$0xff]
    %v615 = vld [vmem:[#allocation2 + $0x368] sm:$0xff]
    %v616 = vld [vmem:[#allocation2 + $0x370] sm:$0xff]
    %v617 = vld [vmem:[#allocation2 + $0x378] sm:$0xff]
    %v618 = vld [vmem:[#allocation2 + $0x380] sm:$0xff]
    %v619 = vld [vmem:[#allocation2 + $0x388] sm:$0xff]
    %v620 = vld [vmem:[#allocation2 + $0x390] sm:$0xff]
    %v621 = vld [vmem:[#allocation2 + $0x398] sm:$0xff]
    %v622 = vld [vmem:[#allocation2 + $0x3a0] sm:$0xff]
    %v623 = vld [vmem:[#allocation2 + $0x3a8] sm:$0xff]
    %v624 = vld [vmem:[#allocation2 + $0x3b0] sm:$0xff]
    %v625 = vld [vmem:[#allocation2 + $0x3b8] sm:$0xff]
    %v626 = vld [vmem:[#allocation2 + $0x3c0] sm:$0xff]
    %v627 = vld [vmem:[#allocation2 + $0x3c8] sm:$0xff]
    %v628 = vld [vmem:[#allocation2 + $0x3d0] sm:$0xff]
    %v629 = vld [vmem:[#allocation2 + $0x3d8] sm:$0xff]
    %v630 = vld [vmem:[#allocation2 + $0x3e0] sm:$0xff]
    %v631 = vld [vmem:[#allocation2 + $0x3e8] sm:$0xff]
    %v632 = vld [vmem:[#allocation2 + $0x3f0] sm:$0xff]
    %v633 = vld [vmem:[#allocation2 + $0x3f8] sm:$0xff]
    %v634 = vld [vmem:[#allocation2 + $0x400] sm:$0xff]
    %v635 = vld [vmem:[#allocation2 + $0x408] sm:$0xff]
    %v636 = vld [vmem:[#allocation2 + $0x410] sm:$0xff]
    %v637 = vld [vmem:[#allocation2 + $0x418] sm:$0xff]
    %v638 = vld [vmem:[#allocation2 + $0x420] sm:$0xff]
    %v639 = vld [vmem:[#allocation2 + $0x428] sm:$0xff]
    %v640 = vld [vmem:[#allocation2 + $0x430] sm:$0xff]
    %v641 = vld [vmem:[#allocation2 + $0x438] sm:$0xff]
    %v642 = vld [vmem:[#allocation2 + $0x440] sm:$0xff]
    %v643 = vld [vmem:[#allocation2 + $0x448] sm:$0xff]
    %v644 = vld [vmem:[#allocation2 + $0x450] sm:$0xff]
    %v645 = vld [vmem:[#allocation2 + $0x458] sm:$0xff]
    %v646 = vld [vmem:[#allocation2 + $0x460] sm:$0xff]
    %v647 = vld [vmem:[#allocation2 + $0x468] sm:$0xff]
    %v648 = vld [vmem:[#allocation2 + $0x470] sm:$0xff]
    %v649 = vld [vmem:[#allocation2 + $0x478] sm:$0xff]
    %v650 = vld [vmem:[#allocation2 + $0x480] sm:$0xff]
    %v651 = vld [vmem:[#allocation2 + $0x488] sm:$0xff]
    %v652 = vld [vmem:[#allocation2 + $0x490] sm:$0xff]
    %v653 = vld [vmem:[#allocation2 + $0x498] sm:$0xff]
    %v654 = vld [vmem:[#allocation2 + $0x4a0] sm:$0xff]
    %v655 = vld [vmem:[#allocation2 + $0x4a8] sm:$0xff]
    %v656 = vld [vmem:[#allocation2 + $0x4b0] sm:$0xff]
    %v657 = vld [vmem:[#allocation2 + $0x4b8] sm:$0xff]
    %v658 = vld [vmem:[#allocation2 + $0x4c0] sm:$0xff]
    %v659 = vld [vmem:[#allocation2 + $0x4c8] sm:$0xff]
    %v660 = vld [vmem:[#allocation2 + $0x4d0] sm:$0xff]
    %v661 = vld [vmem:[#allocation2 + $0x4d8] sm:$0xff]
    %v662 = vld [vmem:[#allocation2 + $0x4e0] sm:$0xff]
    %v663 = vld [vmem:[#allocation2 + $0x4e8] sm:$0xff]
    %v664 = vld [vmem:[#allocation2 + $0x4f0] sm:$0xff]
    %v665 = vld [vmem:[#allocation2 + $0x4f8] sm:$0xff]
    %v666 = vld [vmem:[#allocation2 + $0x500] sm:$0xff]
    %v667 = vld [vmem:[#allocation2 + $0x508] sm:$0xff]
    %v668 = vld [vmem:[#allocation2 + $0x510] sm:$0xff]
    %v669 = vld [vmem:[#allocation2 + $0x518] sm:$0xff]
    %v670 = vld [vmem:[#allocation2 + $0x520] sm:$0xff]
    %v671 = vld [vmem:[#allocation2 + $0x528] sm:$0xff]
    %v672 = vld [vmem:[#allocation2 + $0x530] sm:$0xff]
    %v673 = vld [vmem:[#allocation2 + $0x538] sm:$0xff]
    %v674 = vld [vmem:[#allocation2 + $0x540] sm:$0xff]
    %v675 = vld [vmem:[#allocation2 + $0x548] sm:$0xff]
    %v676 = vld [vmem:[#allocation2 + $0x550] sm:$0xff]
    %v677 = vld [vmem:[#allocation2 + $0x558] sm:$0xff]
    %v678 = vld [vmem:[#allocation2 + $0x560] sm:$0xff]
    %v679 = vld [vmem:[#allocation2 + $0x568] sm:$0xff]
    %v680 = vld [vmem:[#allocation2 + $0x570] sm:$0xff]
    %v681 = vld [vmem:[#allocation2 + $0x578] sm:$0xff]
    %v682 = vld [vmem:[#allocation2 + $0x580] sm:$0xff]
    %v683 = vld [vmem:[#allocation2 + $0x588] sm:$0xff]
    %v684 = vld [vmem:[#allocation2 + $0x590] sm:$0xff]
    %v685 = vld [vmem:[#allocation2 + $0x598] sm:$0xff]
    %v686 = vld [vmem:[#allocation2 + $0x5a0] sm:$0xff]
    %v687 = vld [vmem:[#allocation2 + $0x5a8] sm:$0xff]
    %v688 = vld [vmem:[#allocation2 + $0x5b0] sm:$0xff]
    %v689 = vld [vmem:[#allocation2 + $0x5b8] sm:$0xff]
    %v690 = vld [vmem:[#allocation2 + $0x5c0] sm:$0xff]
    %v691 = vld [vmem:[#allocation2 + $0x5c8] sm:$0xff]
    %v692 = vld [vmem:[#allocation2 + $0x5d0] sm:$0xff]
    %v693 = vld [vmem:[#allocation2 + $0x5d8] sm:$0xff]
    %v694 = vld [vmem:[#allocation2 + $0x5e0] sm:$0xff]
    %v695 = vld [vmem:[#allocation2 + $0x5e8] sm:$0xff]
    %v696 = vld [vmem:[#allocation2 + $0x5f0] sm:$0xff]
    %v697 = vld [vmem:[#allocation2 + $0x5f8] sm:$0xff]
    %v698 = vld [vmem:[#allocation2 + $0x600] sm:$0xff]
    %v699 = vld [vmem:[#allocation2 + $0x608] sm:$0xff]
    %v700 = vld [vmem:[#allocation2 + $0x610] sm:$0xff]
    %v701 = vld [vmem:[#allocation2 + $0x618] sm:$0xff]
    %v702 = vld [vmem:[#allocation2 + $0x620] sm:$0xff]
    %v703 = vld [vmem:[#allocation2 + $0x628] sm:$0xff]
    %v704 = vld [vmem:[#allocation2 + $0x630] sm:$0xff]
    %v705 = vld [vmem:[#allocation2 + $0x638] sm:$0xff]
    %v706 = vld [vmem:[#allocation2 + $0x640] sm:$0xff]
    %v707 = vld [vmem:[#allocation2 + $0x648] sm:$0xff]
    %v708 = vld [vmem:[#allocation2 + $0x650] sm:$0xff]
    %v709 = vld [vmem:[#allocation2 + $0x658] sm:$0xff]
    %v710 = vld [vmem:[#allocation2 + $0x660] sm:$0xff]
    %v711 = vld [vmem:[#allocation2 + $0x668] sm:$0xff]
    %v712 = vld [vmem:[#allocation2 + $0x670] sm:$0xff]
    %v713 = vld [vmem:[#allocation2 + $0x678] sm:$0xff]
    %v714 = vld [vmem:[#allocation2 + $0x680] sm:$0xff]
    %v715 = vld [vmem:[#allocation2 + $0x688] sm:$0xff]
    %v716 = vld [vmem:[#allocation2 + $0x690] sm:$0xff]
    %v717 = vld [vmem:[#allocation2 + $0x698] sm:$0xff]
    %v718 = vld [vmem:[#allocation2 + $0x6a0] sm:$0xff]
    %v719 = vld [vmem:[#allocation2 + $0x6a8] sm:$0xff]
    %v720 = vld [vmem:[#allocation2 + $0x6b0] sm:$0xff]
    %v721 = vld [vmem:[#allocation2 + $0x6b8] sm:$0xff]
    %v722 = vld [vmem:[#allocation2 + $0x6c0] sm:$0xff]
    %v723 = vld [vmem:[#allocation2 + $0x6c8] sm:$0xff]
    %v724 = vld [vmem:[#allocation2 + $0x6d0] sm:$0xff]
    %v725 = vld [vmem:[#allocation2 + $0x6d8] sm:$0xff]
    %v726 = vld [vmem:[#allocation2 + $0x6e0] sm:$0xff]
    %v727 = vld [vmem:[#allocation2 + $0x6e8] sm:$0xff]
    %v728 = vld [vmem:[#allocation2 + $0x6f0] sm:$0xff]
    %v729 = vld [vmem:[#allocation2 + $0x6f8] sm:$0xff]
    %v730 = vld [vmem:[#allocation2 + $0x700] sm:$0xff]
    %v731 = vld [vmem:[#allocation2 + $0x708] sm:$0xff]
    %v732 = vld [vmem:[#allocation2 + $0x710] sm:$0xff]
    %v733 = vld [vmem:[#allocation2 + $0x718] sm:$0xff]
    %v734 = vld [vmem:[#allocation2 + $0x720] sm:$0xff]
    %v735 = vld [vmem:[#allocation2 + $0x728] sm:$0xff]
    %v736 = vld [vmem:[#allocation2 + $0x730] sm:$0xff]
    %v737 = vld [vmem:[#allocation2 + $0x738] sm:$0xff]
    %v738 = vld [vmem:[#allocation2 + $0x740] sm:$0xff]
    %v739 = vld [vmem:[#allocation2 + $0x748] sm:$0xff]
    %v740 = vld [vmem:[#allocation2 + $0x750] sm:$0xff]
    %v741 = vld [vmem:[#allocation2 + $0x758] sm:$0xff]
    %v742 = vld [vmem:[#allocation2 + $0x760] sm:$0xff]
    %v743 = vld [vmem:[#allocation2 + $0x768] sm:$0xff]
    %v744 = vld [vmem:[#allocation2 + $0x770] sm:$0xff]
    %v745 = vld [vmem:[#allocation2 + $0x778] sm:$0xff]
    %v746 = vld [vmem:[#allocation2 + $0x780] sm:$0xff]
    %v747 = vld [vmem:[#allocation2 + $0x788] sm:$0xff]
    %v748 = vld [vmem:[#allocation2 + $0x790] sm:$0xff]
    %v749 = vld [vmem:[#allocation2 + $0x798] sm:$0xff]
    %v750 = vld [vmem:[#allocation2 + $0x7a0] sm:$0xff]
    %v751 = vld [vmem:[#allocation2 + $0x7a8] sm:$0xff]
    %v752 = vld [vmem:[#allocation2 + $0x7b0] sm:$0xff]
    %v753 = vld [vmem:[#allocation2 + $0x7b8] sm:$0xff]
    %v754 = vld [vmem:[#allocation2 + $0x7c0] sm:$0xff]
    %v755 = vld [vmem:[#allocation2 + $0x7c8] sm:$0xff]
    %v756 = vld [vmem:[#allocation2 + $0x7d0] sm:$0xff]
    %v757 = vld [vmem:[#allocation2 + $0x7d8] sm:$0xff]
    %v758 = vld [vmem:[#allocation2 + $0x7e0] sm:$0xff]
    %v759 = vld [vmem:[#allocation2 + $0x7e8] sm:$0xff]
    %v760 = vld [vmem:[#allocation2 + $0x7f0] sm:$0xff]
    %v761 = vld [vmem:[#allocation2 + $0x7f8] sm:$0xff]
    %v762 = vld [vmem:[%s6] sm:$0xf]
    %v764 = vlaneseq
    %v765 = vshrl.u32 %v764, 7
    %v766 = vsub.s32 0, %v765
    %v767 = vrot.slane %v762, %v766
    %v768 = vlaneseq
    %v769 = vshrl.u32 %v768, 7
    %v770 = vsub.s32 1, %v769
    %v771 = vrot.slane %v762, %v770
    %v772 = vlaneseq
    %v773 = vshrl.u32 %v772, 7
    %v774 = vsub.s32 2, %v773
    %v775 = vrot.slane %v762, %v774
    %v776 = vlaneseq
    %v777 = vshrl.u32 %v776, 7
    %v778 = vsub.s32 3, %v777
    %v779 = vrot.slane %v762, %v778
    %v1040 = vunpack.c.l.b16 %v506
    %v1041 = vunpack.c.h.b16 %v506
    %v1042 = vunpack.c.l.b16 %v507
    %v1043 = vunpack.c.h.b16 %v507
    %v1044 = vunpack.c.l.b16 %v508
    %v1045 = vunpack.c.h.b16 %v508
    %v1046 = vunpack.c.l.b16 %v509
    %v1047 = vunpack.c.h.b16 %v509
    %v1048 = vunpack.c.l.b16 %v510
    %v1049 = vunpack.c.h.b16 %v510
    %v1050 = vunpack.c.l.b16 %v511
    %v1051 = vunpack.c.h.b16 %v511
    %v1052 = vunpack.c.l.b16 %v512
    %v1053 = vunpack.c.h.b16 %v512
    %v1054 = vunpack.c.l.b16 %v513
    %v1055 = vunpack.c.h.b16 %v513
    %v1056 = vunpack.c.l.b16 %v514
    %v1057 = vunpack.c.h.b16 %v514
    %v1058 = vunpack.c.l.b16 %v515
    %v1059 = vunpack.c.h.b16 %v515
    %v1060 = vunpack.c.l.b16 %v516
    %v1061 = vunpack.c.h.b16 %v516
    %v1062 = vunpack.c.l.b16 %v517
    %v1063 = vunpack.c.h.b16 %v517
    %v1064 = vunpack.c.l.b16 %v518
    %v1065 = vunpack.c.h.b16 %v518
    %v1066 = vunpack.c.l.b16 %v519
    %v1067 = vunpack.c.h.b16 %v519
    %v1068 = vunpack.c.l.b16 %v520
    %v1069 = vunpack.c.h.b16 %v520
    %v1070 = vunpack.c.l.b16 %v521
    %v1071 = vunpack.c.h.b16 %v521
    %v1072 = vunpack.c.l.b16 %v522
    %v1073 = vunpack.c.h.b16 %v522
    %v1074 = vunpack.c.l.b16 %v523
    %v1075 = vunpack.c.h.b16 %v523
    %v1076 = vunpack.c.l.b16 %v524
    %v1077 = vunpack.c.h.b16 %v524
    %v1078 = vunpack.c.l.b16 %v525
    %v1079 = vunpack.c.h.b16 %v525
    %v1080 = vunpack.c.l.b16 %v526
    %v1081 = vunpack.c.h.b16 %v526
    %v1082 = vunpack.c.l.b16 %v527
    %v1083 = vunpack.c.h.b16 %v527
    %v1084 = vunpack.c.l.b16 %v528
    %v1085 = vunpack.c.h.b16 %v528
    %v1086 = vunpack.c.l.b16 %v529
    %v1087 = vunpack.c.h.b16 %v529
    %v1088 = vunpack.c.l.b16 %v530
    %v1089 = vunpack.c.h.b16 %v530
    %v1090 = vunpack.c.l.b16 %v531
    %v1091 = vunpack.c.h.b16 %v531
    %v1092 = vunpack.c.l.b16 %v532
    %v1093 = vunpack.c.h.b16 %v532
    %v1094 = vunpack.c.l.b16 %v533
    %v1095 = vunpack.c.h.b16 %v533
    %v1096 = vunpack.c.l.b16 %v534
    %v1097 = vunpack.c.h.b16 %v534
    %v1098 = vunpack.c.l.b16 %v535
    %v1099 = vunpack.c.h.b16 %v535
    %v1100 = vunpack.c.l.b16 %v536
    %v1101 = vunpack.c.h.b16 %v536
    %v1102 = vunpack.c.l.b16 %v537
    %v1103 = vunpack.c.h.b16 %v537
    %v1104 = vunpack.c.l.b16 %v538
    %v1105 = vunpack.c.h.b16 %v538
    %v1106 = vunpack.c.l.b16 %v539
    %v1107 = vunpack.c.h.b16 %v539
    %v1108 = vunpack.c.l.b16 %v540
    %v1109 = vunpack.c.h.b16 %v540
    %v1110 = vunpack.c.l.b16 %v541
    %v1111 = vunpack.c.h.b16 %v541
    %v1112 = vunpack.c.l.b16 %v542
    %v1113 = vunpack.c.h.b16 %v542
    %v1114 = vunpack.c.l.b16 %v543
    %v1115 = vunpack.c.h.b16 %v543
    %v1116 = vunpack.c.l.b16 %v544
    %v1117 = vunpack.c.h.b16 %v544
    %v1118 = vunpack.c.l.b16 %v545
    %v1119 = vunpack.c.h.b16 %v545
    %v1120 = vunpack.c.l.b16 %v546
    %v1121 = vunpack.c.h.b16 %v546
    %v1122 = vunpack.c.l.b16 %v547
    %v1123 = vunpack.c.h.b16 %v547
    %v1124 = vunpack.c.l.b16 %v548
    %v1125 = vunpack.c.h.b16 %v548
    %v1126 = vunpack.c.l.b16 %v549
    %v1127 = vunpack.c.h.b16 %v549
    %v1128 = vunpack.c.l.b16 %v550
    %v1129 = vunpack.c.h.b16 %v550
    %v1130 = vunpack.c.l.b16 %v551
    %v1131 = vunpack.c.h.b16 %v551
    %v1132 = vunpack.c.l.b16 %v552
    %v1133 = vunpack.c.h.b16 %v552
    %v1134 = vunpack.c.l.b16 %v553
    %v1135 = vunpack.c.h.b16 %v553
    %v1136 = vunpack.c.l.b16 %v554
    %v1137 = vunpack.c.h.b16 %v554
    %v1138 = vunpack.c.l.b16 %v555
    %v1139 = vunpack.c.h.b16 %v555
    %v1140 = vunpack.c.l.b16 %v556
    %v1141 = vunpack.c.h.b16 %v556
    %v1142 = vunpack.c.l.b16 %v557
    %v1143 = vunpack.c.h.b16 %v557
    %v1144 = vunpack.c.l.b16 %v558
    %v1145 = vunpack.c.h.b16 %v558
    %v1146 = vunpack.c.l.b16 %v559
    %v1147 = vunpack.c.h.b16 %v559
    %v1148 = vunpack.c.l.b16 %v560
    %v1149 = vunpack.c.h.b16 %v560
    %v1150 = vunpack.c.l.b16 %v561
    %v1151 = vunpack.c.h.b16 %v561
    %v1152 = vunpack.c.l.b16 %v562
    %v1153 = vunpack.c.h.b16 %v562
    %v1154 = vunpack.c.l.b16 %v563
    %v1155 = vunpack.c.h.b16 %v563
    %v1156 = vunpack.c.l.b16 %v564
    %v1157 = vunpack.c.h.b16 %v564
    %v1158 = vunpack.c.l.b16 %v565
    %v1159 = vunpack.c.h.b16 %v565
    %v1160 = vunpack.c.l.b16 %v566
    %v1161 = vunpack.c.h.b16 %v566
    %v1162 = vunpack.c.l.b16 %v567
    %v1163 = vunpack.c.h.b16 %v567
    %v1164 = vunpack.c.l.b16 %v568
    %v1165 = vunpack.c.h.b16 %v568
    %v1166 = vunpack.c.l.b16 %v569
    %v1167 = vunpack.c.h.b16 %v569
    %v1168 = vunpack.c.l.b16 %v570
    %v1169 = vunpack.c.h.b16 %v570
    %v1170 = vunpack.c.l.b16 %v571
    %v1171 = vunpack.c.h.b16 %v571
    %v1172 = vunpack.c.l.b16 %v572
    %v1173 = vunpack.c.h.b16 %v572
    %v1174 = vunpack.c.l.b16 %v573
    %v1175 = vunpack.c.h.b16 %v573
    %v1176 = vunpack.c.l.b16 %v574
    %v1177 = vunpack.c.h.b16 %v574
    %v1178 = vunpack.c.l.b16 %v575
    %v1179 = vunpack.c.h.b16 %v575
    %v1180 = vunpack.c.l.b16 %v576
    %v1181 = vunpack.c.h.b16 %v576
    %v1182 = vunpack.c.l.b16 %v577
    %v1183 = vunpack.c.h.b16 %v577
    %v1184 = vunpack.c.l.b16 %v578
    %v1185 = vunpack.c.h.b16 %v578
    %v1186 = vunpack.c.l.b16 %v579
    %v1187 = vunpack.c.h.b16 %v579
    %v1188 = vunpack.c.l.b16 %v580
    %v1189 = vunpack.c.h.b16 %v580
    %v1190 = vunpack.c.l.b16 %v581
    %v1191 = vunpack.c.h.b16 %v581
    %v1192 = vunpack.c.l.b16 %v582
    %v1193 = vunpack.c.h.b16 %v582
    %v1194 = vunpack.c.l.b16 %v583
    %v1195 = vunpack.c.h.b16 %v583
    %v1196 = vunpack.c.l.b16 %v584
    %v1197 = vunpack.c.h.b16 %v584
    %v1198 = vunpack.c.l.b16 %v585
    %v1199 = vunpack.c.h.b16 %v585
    %v1200 = vunpack.c.l.b16 %v586
    %v1201 = vunpack.c.h.b16 %v586
    %v1202 = vunpack.c.l.b16 %v587
    %v1203 = vunpack.c.h.b16 %v587
    %v1204 = vunpack.c.l.b16 %v588
    %v1205 = vunpack.c.h.b16 %v588
    %v1206 = vunpack.c.l.b16 %v589
    %v1207 = vunpack.c.h.b16 %v589
    %v1208 = vunpack.c.l.b16 %v590
    %v1209 = vunpack.c.h.b16 %v590
    %v1210 = vunpack.c.l.b16 %v591
    %v1211 = vunpack.c.h.b16 %v591
    %v1212 = vunpack.c.l.b16 %v592
    %v1213 = vunpack.c.h.b16 %v592
    %v1214 = vunpack.c.l.b16 %v593
    %v1215 = vunpack.c.h.b16 %v593
    %v1216 = vunpack.c.l.b16 %v594
    %v1217 = vunpack.c.h.b16 %v594
    %v1218 = vunpack.c.l.b16 %v595
    %v1219 = vunpack.c.h.b16 %v595
    %v1220 = vunpack.c.l.b16 %v596
    %v1221 = vunpack.c.h.b16 %v596
    %v1222 = vunpack.c.l.b16 %v597
    %v1223 = vunpack.c.h.b16 %v597
    %v1224 = vunpack.c.l.b16 %v598
    %v1225 = vunpack.c.h.b16 %v598
    %v1226 = vunpack.c.l.b16 %v599
    %v1227 = vunpack.c.h.b16 %v599
    %v1228 = vunpack.c.l.b16 %v600
    %v1229 = vunpack.c.h.b16 %v600
    %v1230 = vunpack.c.l.b16 %v601
    %v1231 = vunpack.c.h.b16 %v601
    %v1232 = vunpack.c.l.b16 %v602
    %v1233 = vunpack.c.h.b16 %v602
    %v1234 = vunpack.c.l.b16 %v603
    %v1235 = vunpack.c.h.b16 %v603
    %v1236 = vunpack.c.l.b16 %v604
    %v1237 = vunpack.c.h.b16 %v604
    %v1238 = vunpack.c.l.b16 %v605
    %v1239 = vunpack.c.h.b16 %v605
    %v1240 = vunpack.c.l.b16 %v606
    %v1241 = vunpack.c.h.b16 %v606
    %v1242 = vunpack.c.l.b16 %v607
    %v1243 = vunpack.c.h.b16 %v607
    %v1244 = vunpack.c.l.b16 %v608
    %v1245 = vunpack.c.h.b16 %v608
    %v1246 = vunpack.c.l.b16 %v609
    %v1247 = vunpack.c.h.b16 %v609
    %v1248 = vunpack.c.l.b16 %v610
    %v1249 = vunpack.c.h.b16 %v610
    %v1250 = vunpack.c.l.b16 %v611
    %v1251 = vunpack.c.h.b16 %v611
    %v1252 = vunpack.c.l.b16 %v612
    %v1253 = vunpack.c.h.b16 %v612
    %v1254 = vunpack.c.l.b16 %v613
    %v1255 = vunpack.c.h.b16 %v613
    %v1256 = vunpack.c.l.b16 %v614
    %v1257 = vunpack.c.h.b16 %v614
    %v1258 = vunpack.c.l.b16 %v615
    %v1259 = vunpack.c.h.b16 %v615
    %v1260 = vunpack.c.l.b16 %v616
    %v1261 = vunpack.c.h.b16 %v616
    %v1262 = vunpack.c.l.b16 %v617
    %v1263 = vunpack.c.h.b16 %v617
    %v1264 = vunpack.c.l.b16 %v618
    %v1265 = vunpack.c.h.b16 %v618
    %v1266 = vunpack.c.l.b16 %v619
    %v1267 = vunpack.c.h.b16 %v619
    %v1268 = vunpack.c.l.b16 %v620
    %v1269 = vunpack.c.h.b16 %v620
    %v1270 = vunpack.c.l.b16 %v621
    %v1271 = vunpack.c.h.b16 %v621
    %v1272 = vunpack.c.l.b16 %v622
    %v1273 = vunpack.c.h.b16 %v622
    %v1274 = vunpack.c.l.b16 %v623
    %v1275 = vunpack.c.h.b16 %v623
    %v1276 = vunpack.c.l.b16 %v624
    %v1277 = vunpack.c.h.b16 %v624
    %v1278 = vunpack.c.l.b16 %v625
    %v1279 = vunpack.c.h.b16 %v625
    %v1280 = vunpack.c.l.b16 %v626
    %v1281 = vunpack.c.h.b16 %v626
    %v1282 = vunpack.c.l.b16 %v627
    %v1283 = vunpack.c.h.b16 %v627
    %v1284 = vunpack.c.l.b16 %v628
    %v1285 = vunpack.c.h.b16 %v628
    %v1286 = vunpack.c.l.b16 %v629
    %v1287 = vunpack.c.h.b16 %v629
    %v1288 = vunpack.c.l.b16 %v630
    %v1289 = vunpack.c.h.b16 %v630
    %v1290 = vunpack.c.l.b16 %v631
    %v1291 = vunpack.c.h.b16 %v631
    %v1292 = vunpack.c.l.b16 %v632
    %v1293 = vunpack.c.h.b16 %v632
    %v1294 = vunpack.c.l.b16 %v633
    %v1295 = vunpack.c.h.b16 %v633
    %v1296 = vunpack.c.l.b16 %v634
    %v1297 = vunpack.c.h.b16 %v634
    %v1298 = vunpack.c.l.b16 %v635
    %v1299 = vunpack.c.h.b16 %v635
    %v1300 = vunpack.c.l.b16 %v636
    %v1301 = vunpack.c.h.b16 %v636
    %v1302 = vunpack.c.l.b16 %v637
    %v1303 = vunpack.c.h.b16 %v637
    %v1304 = vunpack.c.l.b16 %v638
    %v1305 = vunpack.c.h.b16 %v638
    %v1306 = vunpack.c.l.b16 %v639
    %v1307 = vunpack.c.h.b16 %v639
    %v1308 = vunpack.c.l.b16 %v640
    %v1309 = vunpack.c.h.b16 %v640
    %v1310 = vunpack.c.l.b16 %v641
    %v1311 = vunpack.c.h.b16 %v641
    %v1312 = vunpack.c.l.b16 %v642
    %v1313 = vunpack.c.h.b16 %v642
    %v1314 = vunpack.c.l.b16 %v643
    %v1315 = vunpack.c.h.b16 %v643
    %v1316 = vunpack.c.l.b16 %v644
    %v1317 = vunpack.c.h.b16 %v644
    %v1318 = vunpack.c.l.b16 %v645
    %v1319 = vunpack.c.h.b16 %v645
    %v1320 = vunpack.c.l.b16 %v646
    %v1321 = vunpack.c.h.b16 %v646
    %v1322 = vunpack.c.l.b16 %v647
    %v1323 = vunpack.c.h.b16 %v647
    %v1324 = vunpack.c.l.b16 %v648
    %v1325 = vunpack.c.h.b16 %v648
    %v1326 = vunpack.c.l.b16 %v649
    %v1327 = vunpack.c.h.b16 %v649
    %v1328 = vunpack.c.l.b16 %v650
    %v1329 = vunpack.c.h.b16 %v650
    %v1330 = vunpack.c.l.b16 %v651
    %v1331 = vunpack.c.h.b16 %v651
    %v1332 = vunpack.c.l.b16 %v652
    %v1333 = vunpack.c.h.b16 %v652
    %v1334 = vunpack.c.l.b16 %v653
    %v1335 = vunpack.c.h.b16 %v653
    %v1336 = vunpack.c.l.b16 %v654
    %v1337 = vunpack.c.h.b16 %v654
    %v1338 = vunpack.c.l.b16 %v655
    %v1339 = vunpack.c.h.b16 %v655
    %v1340 = vunpack.c.l.b16 %v656
    %v1341 = vunpack.c.h.b16 %v656
    %v1342 = vunpack.c.l.b16 %v657
    %v1343 = vunpack.c.h.b16 %v657
    %v1344 = vunpack.c.l.b16 %v658
    %v1345 = vunpack.c.h.b16 %v658
    %v1346 = vunpack.c.l.b16 %v659
    %v1347 = vunpack.c.h.b16 %v659
    %v1348 = vunpack.c.l.b16 %v660
    %v1349 = vunpack.c.h.b16 %v660
    %v1350 = vunpack.c.l.b16 %v661
    %v1351 = vunpack.c.h.b16 %v661
    %v1352 = vunpack.c.l.b16 %v662
    %v1353 = vunpack.c.h.b16 %v662
    %v1354 = vunpack.c.l.b16 %v663
    %v1355 = vunpack.c.h.b16 %v663
    %v1356 = vunpack.c.l.b16 %v664
    %v1357 = vunpack.c.h.b16 %v664
    %v1358 = vunpack.c.l.b16 %v665
    %v1359 = vunpack.c.h.b16 %v665
    %v1360 = vunpack.c.l.b16 %v666
    %v1361 = vunpack.c.h.b16 %v666
    %v1362 = vunpack.c.l.b16 %v667
    %v1363 = vunpack.c.h.b16 %v667
    %v1364 = vunpack.c.l.b16 %v668
    %v1365 = vunpack.c.h.b16 %v668
    %v1366 = vunpack.c.l.b16 %v669
    %v1367 = vunpack.c.h.b16 %v669
    %v1368 = vunpack.c.l.b16 %v670
    %v1369 = vunpack.c.h.b16 %v670
    %v1370 = vunpack.c.l.b16 %v671
    %v1371 = vunpack.c.h.b16 %v671
    %v1372 = vunpack.c.l.b16 %v672
    %v1373 = vunpack.c.h.b16 %v672
    %v1374 = vunpack.c.l.b16 %v673
    %v1375 = vunpack.c.h.b16 %v673
    %v1376 = vunpack.c.l.b16 %v674
    %v1377 = vunpack.c.h.b16 %v674
    %v1378 = vunpack.c.l.b16 %v675
    %v1379 = vunpack.c.h.b16 %v675
    %v1380 = vunpack.c.l.b16 %v676
    %v1381 = vunpack.c.h.b16 %v676
    %v1382 = vunpack.c.l.b16 %v677
    %v1383 = vunpack.c.h.b16 %v677
    %v1384 = vunpack.c.l.b16 %v678
    %v1385 = vunpack.c.h.b16 %v678
    %v1386 = vunpack.c.l.b16 %v679
    %v1387 = vunpack.c.h.b16 %v679
    %v1388 = vunpack.c.l.b16 %v680
    %v1389 = vunpack.c.h.b16 %v680
    %v1390 = vunpack.c.l.b16 %v681
    %v1391 = vunpack.c.h.b16 %v681
    %v1392 = vunpack.c.l.b16 %v682
    %v1393 = vunpack.c.h.b16 %v682
    %v1394 = vunpack.c.l.b16 %v683
    %v1395 = vunpack.c.h.b16 %v683
    %v1396 = vunpack.c.l.b16 %v684
    %v1397 = vunpack.c.h.b16 %v684
    %v1398 = vunpack.c.l.b16 %v685
    %v1399 = vunpack.c.h.b16 %v685
    %v1400 = vunpack.c.l.b16 %v686
    %v1401 = vunpack.c.h.b16 %v686
    %v1402 = vunpack.c.l.b16 %v687
    %v1403 = vunpack.c.h.b16 %v687
    %v1404 = vunpack.c.l.b16 %v688
    %v1405 = vunpack.c.h.b16 %v688
    %v1406 = vunpack.c.l.b16 %v689
    %v1407 = vunpack.c.h.b16 %v689
    %v1408 = vunpack.c.l.b16 %v690
    %v1409 = vunpack.c.h.b16 %v690
    %v1410 = vunpack.c.l.b16 %v691
    %v1411 = vunpack.c.h.b16 %v691
    %v1412 = vunpack.c.l.b16 %v692
    %v1413 = vunpack.c.h.b16 %v692
    %v1414 = vunpack.c.l.b16 %v693
    %v1415 = vunpack.c.h.b16 %v693
    %v1416 = vunpack.c.l.b16 %v694
    %v1417 = vunpack.c.h.b16 %v694
    %v1418 = vunpack.c.l.b16 %v695
    %v1419 = vunpack.c.h.b16 %v695
    %v1420 = vunpack.c.l.b16 %v696
    %v1421 = vunpack.c.h.b16 %v696
    %v1422 = vunpack.c.l.b16 %v697
    %v1423 = vunpack.c.h.b16 %v697
    %v1424 = vunpack.c.l.b16 %v698
    %v1425 = vunpack.c.h.b16 %v698
    %v1426 = vunpack.c.l.b16 %v699
    %v1427 = vunpack.c.h.b16 %v699
    %v1428 = vunpack.c.l.b16 %v700
    %v1429 = vunpack.c.h.b16 %v700
    %v1430 = vunpack.c.l.b16 %v701
    %v1431 = vunpack.c.h.b16 %v701
    %v1432 = vunpack.c.l.b16 %v702
    %v1433 = vunpack.c.h.b16 %v702
    %v1434 = vunpack.c.l.b16 %v703
    %v1435 = vunpack.c.h.b16 %v703
    %v1436 = vunpack.c.l.b16 %v704
    %v1437 = vunpack.c.h.b16 %v704
    %v1438 = vunpack.c.l.b16 %v705
    %v1439 = vunpack.c.h.b16 %v705
    %v1440 = vunpack.c.l.b16 %v706
    %v1441 = vunpack.c.h.b16 %v706
    %v1442 = vunpack.c.l.b16 %v707
    %v1443 = vunpack.c.h.b16 %v707
    %v1444 = vunpack.c.l.b16 %v708
    %v1445 = vunpack.c.h.b16 %v708
    %v1446 = vunpack.c.l.b16 %v709
    %v1447 = vunpack.c.h.b16 %v709
    %v1448 = vunpack.c.l.b16 %v710
    %v1449 = vunpack.c.h.b16 %v710
    %v1450 = vunpack.c.l.b16 %v711
    %v1451 = vunpack.c.h.b16 %v711
    %v1452 = vunpack.c.l.b16 %v712
    %v1453 = vunpack.c.h.b16 %v712
    %v1454 = vunpack.c.l.b16 %v713
    %v1455 = vunpack.c.h.b16 %v713
    %v1456 = vunpack.c.l.b16 %v714
    %v1457 = vunpack.c.h.b16 %v714
    %v1458 = vunpack.c.l.b16 %v715
    %v1459 = vunpack.c.h.b16 %v715
    %v1460 = vunpack.c.l.b16 %v716
    %v1461 = vunpack.c.h.b16 %v716
    %v1462 = vunpack.c.l.b16 %v717
    %v1463 = vunpack.c.h.b16 %v717
    %v1464 = vunpack.c.l.b16 %v718
    %v1465 = vunpack.c.h.b16 %v718
    %v1466 = vunpack.c.l.b16 %v719
    %v1467 = vunpack.c.h.b16 %v719
    %v1468 = vunpack.c.l.b16 %v720
    %v1469 = vunpack.c.h.b16 %v720
    %v1470 = vunpack.c.l.b16 %v721
    %v1471 = vunpack.c.h.b16 %v721
    %v1472 = vunpack.c.l.b16 %v722
    %v1473 = vunpack.c.h.b16 %v722
    %v1474 = vunpack.c.l.b16 %v723
    %v1475 = vunpack.c.h.b16 %v723
    %v1476 = vunpack.c.l.b16 %v724
    %v1477 = vunpack.c.h.b16 %v724
    %v1478 = vunpack.c.l.b16 %v725
    %v1479 = vunpack.c.h.b16 %v725
    %v1480 = vunpack.c.l.b16 %v726
    %v1481 = vunpack.c.h.b16 %v726
    %v1482 = vunpack.c.l.b16 %v727
    %v1483 = vunpack.c.h.b16 %v727
    %v1484 = vunpack.c.l.b16 %v728
    %v1485 = vunpack.c.h.b16 %v728
    %v1486 = vunpack.c.l.b16 %v729
    %v1487 = vunpack.c.h.b16 %v729
    %v1488 = vunpack.c.l.b16 %v730
    %v1489 = vunpack.c.h.b16 %v730
    %v1490 = vunpack.c.l.b16 %v731
    %v1491 = vunpack.c.h.b16 %v731
    %v1492 = vunpack.c.l.b16 %v732
    %v1493 = vunpack.c.h.b16 %v732
    %v1494 = vunpack.c.l.b16 %v733
    %v1495 = vunpack.c.h.b16 %v733
    %v1496 = vunpack.c.l.b16 %v734
    %v1497 = vunpack.c.h.b16 %v734
    %v1498 = vunpack.c.l.b16 %v735
    %v1499 = vunpack.c.h.b16 %v735
    %v1500 = vunpack.c.l.b16 %v736
    %v1501 = vunpack.c.h.b16 %v736
    %v1502 = vunpack.c.l.b16 %v737
    %v1503 = vunpack.c.h.b16 %v737
    %v1504 = vunpack.c.l.b16 %v738
    %v1505 = vunpack.c.h.b16 %v738
    %v1506 = vunpack.c.l.b16 %v739
    %v1507 = vunpack.c.h.b16 %v739
    %v1508 = vunpack.c.l.b16 %v740
    %v1509 = vunpack.c.h.b16 %v740
    %v1510 = vunpack.c.l.b16 %v741
    %v1511 = vunpack.c.h.b16 %v741
    %v1512 = vunpack.c.l.b16 %v742
    %v1513 = vunpack.c.h.b16 %v742
    %v1514 = vunpack.c.l.b16 %v743
    %v1515 = vunpack.c.h.b16 %v743
    %v1516 = vunpack.c.l.b16 %v744
    %v1517 = vunpack.c.h.b16 %v744
    %v1518 = vunpack.c.l.b16 %v745
    %v1519 = vunpack.c.h.b16 %v745
    %v1520 = vunpack.c.l.b16 %v746
    %v1521 = vunpack.c.h.b16 %v746
    %v1522 = vunpack.c.l.b16 %v747
    %v1523 = vunpack.c.h.b16 %v747
    %v1524 = vunpack.c.l.b16 %v748
    %v1525 = vunpack.c.h.b16 %v748
    %v1526 = vunpack.c.l.b16 %v749
    %v1527 = vunpack.c.h.b16 %v749
    %v1528 = vunpack.c.l.b16 %v750
    %v1529 = vunpack.c.h.b16 %v750
    %v1530 = vunpack.c.l.b16 %v751
    %v1531 = vunpack.c.h.b16 %v751
    %v1532 = vunpack.c.l.b16 %v752
    %v1533 = vunpack.c.h.b16 %v752
    %v1534 = vunpack.c.l.b16 %v753
    %v1535 = vunpack.c.h.b16 %v753
    %v1536 = vunpack.c.l.b16 %v754
    %v1537 = vunpack.c.h.b16 %v754
    %v1538 = vunpack.c.l.b16 %v755
    %v1539 = vunpack.c.h.b16 %v755
    %v1540 = vunpack.c.l.b16 %v756
    %v1541 = vunpack.c.h.b16 %v756
    %v1542 = vunpack.c.l.b16 %v757
    %v1543 = vunpack.c.h.b16 %v757
    %v1544 = vunpack.c.l.b16 %v758
    %v1545 = vunpack.c.h.b16 %v758
    %v1546 = vunpack.c.l.b16 %v759
    %v1547 = vunpack.c.h.b16 %v759
    %v1548 = vunpack.c.l.b16 %v760
    %v1549 = vunpack.c.h.b16 %v760
    %v1550 = vunpack.c.l.b16 %v761
    %v1551 = vunpack.c.h.b16 %v761
    %v1552 = vpack.c.b16 %v1044, %v1040
    %v1553 = vpack.c.b16 %v1045, %v1041
    %v1554 = vpack.c.b16 %v1046, %v1042
    %v1555 = vpack.c.b16 %v1047, %v1043
    %v1556 = vpack.c.b16 %v1052, %v1048
    %v1557 = vpack.c.b16 %v1053, %v1049
    %v1558 = vpack.c.b16 %v1054, %v1050
    %v1559 = vpack.c.b16 %v1055, %v1051
    %v1560 = vpack.c.b16 %v1060, %v1056
    %v1561 = vpack.c.b16 %v1061, %v1057
    %v1562 = vpack.c.b16 %v1062, %v1058
    %v1563 = vpack.c.b16 %v1063, %v1059
    %v1564 = vpack.c.b16 %v1068, %v1064
    %v1565 = vpack.c.b16 %v1069, %v1065
    %v1566 = vpack.c.b16 %v1070, %v1066
    %v1567 = vpack.c.b16 %v1071, %v1067
    %v1568 = vpack.c.b16 %v1076, %v1072
    %v1569 = vpack.c.b16 %v1077, %v1073
    %v1570 = vpack.c.b16 %v1078, %v1074
    %v1571 = vpack.c.b16 %v1079, %v1075
    %v1572 = vpack.c.b16 %v1084, %v1080
    %v1573 = vpack.c.b16 %v1085, %v1081
    %v1574 = vpack.c.b16 %v1086, %v1082
    %v1575 = vpack.c.b16 %v1087, %v1083
    %v1576 = vpack.c.b16 %v1092, %v1088
    %v1577 = vpack.c.b16 %v1093, %v1089
    %v1578 = vpack.c.b16 %v1094, %v1090
    %v1579 = vpack.c.b16 %v1095, %v1091
    %v1580 = vpack.c.b16 %v1100, %v1096
    %v1581 = vpack.c.b16 %v1101, %v1097
    %v1582 = vpack.c.b16 %v1102, %v1098
    %v1583 = vpack.c.b16 %v1103, %v1099
    %v1584 = vpack.c.b16 %v1108, %v1104
    %v1585 = vpack.c.b16 %v1109, %v1105
    %v1586 = vpack.c.b16 %v1110, %v1106
    %v1587 = vpack.c.b16 %v1111, %v1107
    %v1588 = vpack.c.b16 %v1116, %v1112
    %v1589 = vpack.c.b16 %v1117, %v1113
    %v1590 = vpack.c.b16 %v1118, %v1114
    %v1591 = vpack.c.b16 %v1119, %v1115
    %v1592 = vpack.c.b16 %v1124, %v1120
    %v1593 = vpack.c.b16 %v1125, %v1121
    %v1594 = vpack.c.b16 %v1126, %v1122
    %v1595 = vpack.c.b16 %v1127, %v1123
    %v1596 = vpack.c.b16 %v1132, %v1128
    %v1597 = vpack.c.b16 %v1133, %v1129
    %v1598 = vpack.c.b16 %v1134, %v1130
    %v1599 = vpack.c.b16 %v1135, %v1131
    %v1600 = vpack.c.b16 %v1140, %v1136
    %v1601 = vpack.c.b16 %v1141, %v1137
    %v1602 = vpack.c.b16 %v1142, %v1138
    %v1603 = vpack.c.b16 %v1143, %v1139
    %v1604 = vpack.c.b16 %v1148, %v1144
    %v1605 = vpack.c.b16 %v1149, %v1145
    %v1606 = vpack.c.b16 %v1150, %v1146
    %v1607 = vpack.c.b16 %v1151, %v1147
    %v1608 = vpack.c.b16 %v1156, %v1152
    %v1609 = vpack.c.b16 %v1157, %v1153
    %v1610 = vpack.c.b16 %v1158, %v1154
    %v1611 = vpack.c.b16 %v1159, %v1155
    %v1612 = vpack.c.b16 %v1164, %v1160
    %v1613 = vpack.c.b16 %v1165, %v1161
    %v1614 = vpack.c.b16 %v1166, %v1162
    %v1615 = vpack.c.b16 %v1167, %v1163
    %v1616 = vpack.c.b16 %v1172, %v1168
    %v1617 = vpack.c.b16 %v1173, %v1169
    %v1618 = vpack.c.b16 %v1174, %v1170
    %v1619 = vpack.c.b16 %v1175, %v1171
    %v1620 = vpack.c.b16 %v1180, %v1176
    %v1621 = vpack.c.b16 %v1181, %v1177
    %v1622 = vpack.c.b16 %v1182, %v1178
    %v1623 = vpack.c.b16 %v1183, %v1179
    %v1624 = vpack.c.b16 %v1188, %v1184
    %v1625 = vpack.c.b16 %v1189, %v1185
    %v1626 = vpack.c.b16 %v1190, %v1186
    %v1627 = vpack.c.b16 %v1191, %v1187
    %v1628 = vpack.c.b16 %v1196, %v1192
    %v1629 = vpack.c.b16 %v1197, %v1193
    %v1630 = vpack.c.b16 %v1198, %v1194
    %v1631 = vpack.c.b16 %v1199, %v1195
    %v1632 = vpack.c.b16 %v1204, %v1200
    %v1633 = vpack.c.b16 %v1205, %v1201
    %v1634 = vpack.c.b16 %v1206, %v1202
    %v1635 = vpack.c.b16 %v1207, %v1203
    %v1636 = vpack.c.b16 %v1212, %v1208
    %v1637 = vpack.c.b16 %v1213, %v1209
    %v1638 = vpack.c.b16 %v1214, %v1210
    %v1639 = vpack.c.b16 %v1215, %v1211
    %v1640 = vpack.c.b16 %v1220, %v1216
    %v1641 = vpack.c.b16 %v1221, %v1217
    %v1642 = vpack.c.b16 %v1222, %v1218
    %v1643 = vpack.c.b16 %v1223, %v1219
    %v1644 = vpack.c.b16 %v1228, %v1224
    %v1645 = vpack.c.b16 %v1229, %v1225
    %v1646 = vpack.c.b16 %v1230, %v1226
    %v1647 = vpack.c.b16 %v1231, %v1227
    %v1648 = vpack.c.b16 %v1236, %v1232
    %v1649 = vpack.c.b16 %v1237, %v1233
    %v1650 = vpack.c.b16 %v1238, %v1234
    %v1651 = vpack.c.b16 %v1239, %v1235
    %v1652 = vpack.c.b16 %v1244, %v1240
    %v1653 = vpack.c.b16 %v1245, %v1241
    %v1654 = vpack.c.b16 %v1246, %v1242
    %v1655 = vpack.c.b16 %v1247, %v1243
    %v1656 = vpack.c.b16 %v1252, %v1248
    %v1657 = vpack.c.b16 %v1253, %v1249
    %v1658 = vpack.c.b16 %v1254, %v1250
    %v1659 = vpack.c.b16 %v1255, %v1251
    %v1660 = vpack.c.b16 %v1260, %v1256
    %v1661 = vpack.c.b16 %v1261, %v1257
    %v1662 = vpack.c.b16 %v1262, %v1258
    %v1663 = vpack.c.b16 %v1263, %v1259
    %v1664 = vpack.c.b16 %v1268, %v1264
    %v1665 = vpack.c.b16 %v1269, %v1265
    %v1666 = vpack.c.b16 %v1270, %v1266
    %v1667 = vpack.c.b16 %v1271, %v1267
    %v1668 = vpack.c.b16 %v1276, %v1272
    %v1669 = vpack.c.b16 %v1277, %v1273
    %v1670 = vpack.c.b16 %v1278, %v1274
    %v1671 = vpack.c.b16 %v1279, %v1275
    %v1672 = vpack.c.b16 %v1284, %v1280
    %v1673 = vpack.c.b16 %v1285, %v1281
    %v1674 = vpack.c.b16 %v1286, %v1282
    %v1675 = vpack.c.b16 %v1287, %v1283
    %v1676 = vpack.c.b16 %v1292, %v1288
    %v1677 = vpack.c.b16 %v1293, %v1289
    %v1678 = vpack.c.b16 %v1294, %v1290
    %v1679 = vpack.c.b16 %v1295, %v1291
    %v1680 = vpack.c.b16 %v1300, %v1296
    %v1681 = vpack.c.b16 %v1301, %v1297
    %v1682 = vpack.c.b16 %v1302, %v1298
    %v1683 = vpack.c.b16 %v1303, %v1299
    %v1684 = vpack.c.b16 %v1308, %v1304
    %v1685 = vpack.c.b16 %v1309, %v1305
    %v1686 = vpack.c.b16 %v1310, %v1306
    %v1687 = vpack.c.b16 %v1311, %v1307
    %v1688 = vpack.c.b16 %v1316, %v1312
    %v1689 = vpack.c.b16 %v1317, %v1313
    %v1690 = vpack.c.b16 %v1318, %v1314
    %v1691 = vpack.c.b16 %v1319, %v1315
    %v1692 = vpack.c.b16 %v1324, %v1320
    %v1693 = vpack.c.b16 %v1325, %v1321
    %v1694 = vpack.c.b16 %v1326, %v1322
    %v1695 = vpack.c.b16 %v1327, %v1323
    %v1696 = vpack.c.b16 %v1332, %v1328
    %v1697 = vpack.c.b16 %v1333, %v1329
    %v1698 = vpack.c.b16 %v1334, %v1330
    %v1699 = vpack.c.b16 %v1335, %v1331
    %v1700 = vpack.c.b16 %v1340, %v1336
    %v1701 = vpack.c.b16 %v1341, %v1337
    %v1702 = vpack.c.b16 %v1342, %v1338
    %v1703 = vpack.c.b16 %v1343, %v1339
    %v1704 = vpack.c.b16 %v1348, %v1344
    %v1705 = vpack.c.b16 %v1349, %v1345
    %v1706 = vpack.c.b16 %v1350, %v1346
    %v1707 = vpack.c.b16 %v1351, %v1347
    %v1708 = vpack.c.b16 %v1356, %v1352
    %v1709 = vpack.c.b16 %v1357, %v1353
    %v1710 = vpack.c.b16 %v1358, %v1354
    %v1711 = vpack.c.b16 %v1359, %v1355
    %v1712 = vpack.c.b16 %v1364, %v1360
    %v1713 = vpack.c.b16 %v1365, %v1361
    %v1714 = vpack.c.b16 %v1366, %v1362
    %v1715 = vpack.c.b16 %v1367, %v1363
    %v1716 = vpack.c.b16 %v1372, %v1368
    %v1717 = vpack.c.b16 %v1373, %v1369
    %v1718 = vpack.c.b16 %v1374, %v1370
    %v1719 = vpack.c.b16 %v1375, %v1371
    %v1720 = vpack.c.b16 %v1380, %v1376
    %v1721 = vpack.c.b16 %v1381, %v1377
    %v1722 = vpack.c.b16 %v1382, %v1378
    %v1723 = vpack.c.b16 %v1383, %v1379
    %v1724 = vpack.c.b16 %v1388, %v1384
    %v1725 = vpack.c.b16 %v1389, %v1385
    %v1726 = vpack.c.b16 %v1390, %v1386
    %v1727 = vpack.c.b16 %v1391, %v1387
    %v1728 = vpack.c.b16 %v1396, %v1392
    %v1729 = vpack.c.b16 %v1397, %v1393
    %v1730 = vpack.c.b16 %v1398, %v1394
    %v1731 = vpack.c.b16 %v1399, %v1395
    %v1732 = vpack.c.b16 %v1404, %v1400
    %v1733 = vpack.c.b16 %v1405, %v1401
    %v1734 = vpack.c.b16 %v1406, %v1402
    %v1735 = vpack.c.b16 %v1407, %v1403
    %v1736 = vpack.c.b16 %v1412, %v1408
    %v1737 = vpack.c.b16 %v1413, %v1409
    %v1738 = vpack.c.b16 %v1414, %v1410
    %v1739 = vpack.c.b16 %v1415, %v1411
    %v1740 = vpack.c.b16 %v1420, %v1416
    %v1741 = vpack.c.b16 %v1421, %v1417
    %v1742 = vpack.c.b16 %v1422, %v1418
    %v1743 = vpack.c.b16 %v1423, %v1419
    %v1744 = vpack.c.b16 %v1428, %v1424
    %v1745 = vpack.c.b16 %v1429, %v1425
    %v1746 = vpack.c.b16 %v1430, %v1426
    %v1747 = vpack.c.b16 %v1431, %v1427
    %v1748 = vpack.c.b16 %v1436, %v1432
    %v1749 = vpack.c.b16 %v1437, %v1433
    %v1750 = vpack.c.b16 %v1438, %v1434
    %v1751 = vpack.c.b16 %v1439, %v1435
    %v1752 = vpack.c.b16 %v1444, %v1440
    %v1753 = vpack.c.b16 %v1445, %v1441
    %v1754 = vpack.c.b16 %v1446, %v1442
    %v1755 = vpack.c.b16 %v1447, %v1443
    %v1756 = vpack.c.b16 %v1452, %v1448
    %v1757 = vpack.c.b16 %v1453, %v1449
    %v1758 = vpack.c.b16 %v1454, %v1450
    %v1759 = vpack.c.b16 %v1455, %v1451
    %v1760 = vpack.c.b16 %v1460, %v1456
    %v1761 = vpack.c.b16 %v1461, %v1457
    %v1762 = vpack.c.b16 %v1462, %v1458
    %v1763 = vpack.c.b16 %v1463, %v1459
    %v1764 = vpack.c.b16 %v1468, %v1464
    %v1765 = vpack.c.b16 %v1469, %v1465
    %v1766 = vpack.c.b16 %v1470, %v1466
    %v1767 = vpack.c.b16 %v1471, %v1467
    %v1768 = vpack.c.b16 %v1476, %v1472
    %v1769 = vpack.c.b16 %v1477, %v1473
    %v1770 = vpack.c.b16 %v1478, %v1474
    %v1771 = vpack.c.b16 %v1479, %v1475
    %v1772 = vpack.c.b16 %v1484, %v1480
    %v1773 = vpack.c.b16 %v1485, %v1481
    %v1774 = vpack.c.b16 %v1486, %v1482
    %v1775 = vpack.c.b16 %v1487, %v1483
    %v1776 = vpack.c.b16 %v1492, %v1488
    %v1777 = vpack.c.b16 %v1493, %v1489
    %v1778 = vpack.c.b16 %v1494, %v1490
    %v1779 = vpack.c.b16 %v1495, %v1491
    %v1780 = vpack.c.b16 %v1500, %v1496
    %v1781 = vpack.c.b16 %v1501, %v1497
    %v1782 = vpack.c.b16 %v1502, %v1498
    %v1783 = vpack.c.b16 %v1503, %v1499
    %v1784 = vpack.c.b16 %v1508, %v1504
    %v1785 = vpack.c.b16 %v1509, %v1505
    %v1786 = vpack.c.b16 %v1510, %v1506
    %v1787 = vpack.c.b16 %v1511, %v1507
    %v1788 = vpack.c.b16 %v1516, %v1512
    %v1789 = vpack.c.b16 %v1517, %v1513
    %v1790 = vpack.c.b16 %v1518, %v1514
    %v1791 = vpack.c.b16 %v1519, %v1515
    %v1792 = vpack.c.b16 %v1524, %v1520
    %v1793 = vpack.c.b16 %v1525, %v1521
    %v1794 = vpack.c.b16 %v1526, %v1522
    %v1795 = vpack.c.b16 %v1527, %v1523
    %v1796 = vpack.c.b16 %v1532, %v1528
    %v1797 = vpack.c.b16 %v1533, %v1529
    %v1798 = vpack.c.b16 %v1534, %v1530
    %v1799 = vpack.c.b16 %v1535, %v1531
    %v1800 = vpack.c.b16 %v1540, %v1536
    %v1801 = vpack.c.b16 %v1541, %v1537
    %v1802 = vpack.c.b16 %v1542, %v1538
    %v1803 = vpack.c.b16 %v1543, %v1539
    %v1804 = vpack.c.b16 %v1548, %v1544
    %v1805 = vpack.c.b16 %v1549, %v1545
    %v1806 = vpack.c.b16 %v1550, %v1546
    %v1807 = vpack.c.b16 %v1551, %v1547
    %2064 = vmatprep.subr.bf16.mxu0 %v1553
    %2065 = vmatpush1.bf16.msra.mxu0 %v1552
    %2066 = vmatprep.subr.bf16.mxu0 %v1557
    %2067 = vmatpush1.bf16.msra.mxu0 %v1556
    %2068 = vmatprep.subr.bf16.mxu0 %v1561
    %2069 = vmatpush1.bf16.msra.mxu0 %v1560
    %2070 = vmatprep.subr.bf16.mxu0 %v1565
    %2071 = vmatpush1.bf16.msra.mxu0 %v1564
    %2072 = vmatprep.subr.bf16.mxu0 %v1569
    %2073 = vmatpush1.bf16.msra.mxu0 %v1568
    %2074 = vmatprep.subr.bf16.mxu0 %v1573
    %2075 = vmatpush1.bf16.msra.mxu0 %v1572
    %2076 = vmatprep.subr.bf16.mxu0 %v1577
    %2077 = vmatpush1.bf16.msra.mxu0 %v1576
    %2078 = vmatprep.subr.bf16.mxu0 %v1581
    %2079 = vmatpush1.bf16.msra.mxu0 %v1580
    %2080 = vmatprep.subr.bf16.mxu0 %v1585
    %2081 = vmatpush1.bf16.msra.mxu0 %v1584
    %2082 = vmatprep.subr.bf16.mxu0 %v1589
    %2083 = vmatpush1.bf16.msra.mxu0 %v1588
    %2084 = vmatprep.subr.bf16.mxu0 %v1593
    %2085 = vmatpush1.bf16.msra.mxu0 %v1592
    %2086 = vmatprep.subr.bf16.mxu0 %v1597
    %2087 = vmatpush1.bf16.msra.mxu0 %v1596
    %2088 = vmatprep.subr.bf16.mxu0 %v1601
    %2089 = vmatpush1.bf16.msra.mxu0 %v1600
    %2090 = vmatprep.subr.bf16.mxu0 %v1605
    %2091 = vmatpush1.bf16.msra.mxu0 %v1604
    %2092 = vmatprep.subr.bf16.mxu0 %v1609
    %2093 = vmatpush1.bf16.msra.mxu0 %v1608
    %2094 = vmatprep.subr.bf16.mxu0 %v1613
    %2095 = vmatpush1.bf16.msra.mxu0 %v1612
    %2096 = vmatprep.mubr.bf16.mxu0 %v499
    %2097 = vmatmul.mubr.bf16.gmra.mrb[0].mxu0 %v498
    %v2098 = vpop.f32.mrb[0].mxu0
    %v2099 = vadd.f32 %v767, %v2098
    %v2100 = vpop.f32.mrb[0].mxu0
    %v2101 = vadd.f32 %v771, %v2100
    %v2102 = vpop.f32.mrb[0].mxu0
    %v2103 = vpop.f32.mrb[0].mxu0
    %2104 = vdwg.mxu0
    %2105 = vmatprep.subr.bf16.mxu0 %v1617
    %2106 = vmatpush1.bf16.msra.mxu0 %v1616
    %2107 = vmatprep.subr.bf16.mxu0 %v1621
    %2108 = vmatpush1.bf16.msra.mxu0 %v1620
    %2109 = vmatprep.subr.bf16.mxu0 %v1625
    %2110 = vmatpush1.bf16.msra.mxu0 %v1624
    %2111 = vmatprep.subr.bf16.mxu0 %v1629
    %2112 = vmatpush1.bf16.msra.mxu0 %v1628
    %2113 = vmatprep.subr.bf16.mxu0 %v1633
    %2114 = vmatpush1.bf16.msra.mxu0 %v1632
    %2115 = vmatprep.subr.bf16.mxu0 %v1637
    %2116 = vmatpush1.bf16.msra.mxu0 %v1636
    %2117 = vmatprep.subr.bf16.mxu0 %v1641
    %2118 = vmatpush1.bf16.msra.mxu0 %v1640
    %2119 = vmatprep.subr.bf16.mxu0 %v1645
    %2120 = vmatpush1.bf16.msra.mxu0 %v1644
    %2121 = vmatprep.subr.bf16.mxu0 %v1649
    %2122 = vmatpush1.bf16.msra.mxu0 %v1648
    %2123 = vmatprep.subr.bf16.mxu0 %v1653
    %2124 = vmatpush1.bf16.msra.mxu0 %v1652
    %2125 = vmatprep.subr.bf16.mxu0 %v1657
    %2126 = vmatpush1.bf16.msra.mxu0 %v1656
    %2127 = vmatprep.subr.bf16.mxu0 %v1661
    %2128 = vmatpush1.bf16.msra.mxu0 %v1660
    %2129 = vmatprep.subr.bf16.mxu0 %v1665
    %2130 = vmatpush1.bf16.msra.mxu0 %v1664
    %2131 = vmatprep.subr.bf16.mxu0 %v1669
    %2132 = vmatpush1.bf16.msra.mxu0 %v1668
    %2133 = vmatprep.subr.bf16.mxu0 %v1673
    %2134 = vmatpush1.bf16.msra.mxu0 %v1672
    %2135 = vmatprep.subr.bf16.mxu0 %v1677
    %2136 = vmatpush1.bf16.msra.mxu0 %v1676
    %2137 = vmatprep.mubr.bf16.mxu0 %v501
    %2138 = vmatmul.mubr.bf16.gmra.mrb[0].mxu0 %v500
    %v2139 = vpop.f32.mrb[0].mxu0
    %v2140 = vadd.f32 %v2099, %v2139
    %v2141 = vpop.f32.mrb[0].mxu0
    %v2142 = vadd.f32 %v2101, %v2141
    %v2143 = vpop.f32.mrb[0].mxu0
    %v2144 = vpop.f32.mrb[0].mxu0
    %2145 = vdwg.mxu0
    %2146 = vmatprep.subr.bf16.mxu0 %v1681
    %2147 = vmatpush1.bf16.msra.mxu0 %v1680
    %2148 = vmatprep.subr.bf16.mxu0 %v1685
    %2149 = vmatpush1.bf16.msra.mxu0 %v1684
    %2150 = vmatprep.subr.bf16.mxu0 %v1689
    %2151 = vmatpush1.bf16.msra.mxu0 %v1688
    %2152 = vmatprep.subr.bf16.mxu0 %v1693
    %2153 = vmatpush1.bf16.msra.mxu0 %v1692
    %2154 = vmatprep.subr.bf16.mxu0 %v1697
    %2155 = vmatpush1.bf16.msra.mxu0 %v1696
    %2156 = vmatprep.subr.bf16.mxu0 %v1701
    %2157 = vmatpush1.bf16.msra.mxu0 %v1700
    %2158 = vmatprep.subr.bf16.mxu0 %v1705
    %2159 = vmatpush1.bf16.msra.mxu0 %v1704
    %2160 = vmatprep.subr.bf16.mxu0 %v1709
    %2161 = vmatpush1.bf16.msra.mxu0 %v1708
    %2162 = vmatprep.subr.bf16.mxu0 %v1713
    %2163 = vmatpush1.bf16.msra.mxu0 %v1712
    %2164 = vmatprep.subr.bf16.mxu0 %v1717
    %2165 = vmatpush1.bf16.msra.mxu0 %v1716
    %2166 = vmatprep.subr.bf16.mxu0 %v1721
    %2167 = vmatpush1.bf16.msra.mxu0 %v1720
    %2168 = vmatprep.subr.bf16.mxu0 %v1725
    %2169 = vmatpush1.bf16.msra.mxu0 %v1724
    %2170 = vmatprep.subr.bf16.mxu0 %v1729
    %2171 = vmatpush1.bf16.msra.mxu0 %v1728
    %2172 = vmatprep.subr.bf16.mxu0 %v1733
    %2173 = vmatpush1.bf16.msra.mxu0 %v1732
    %2174 = vmatprep.subr.bf16.mxu0 %v1737
    %2175 = vmatpush1.bf16.msra.mxu0 %v1736
    %2176 = vmatprep.subr.bf16.mxu0 %v1741
    %2177 = vmatpush1.bf16.msra.mxu0 %v1740
    %2178 = vmatprep.mubr.bf16.mxu0 %v503
    %2179 = vmatmul.mubr.bf16.gmra.mrb[0].mxu0 %v502
    %v2180 = vpop.f32.mrb[0].mxu0
    %v2181 = vadd.f32 %v2140, %v2180
    %v2182 = vpop.f32.mrb[0].mxu0
    %v2183 = vadd.f32 %v2142, %v2182
    %v2184 = vpop.f32.mrb[0].mxu0
    %v2185 = vpop.f32.mrb[0].mxu0
    %2186 = vdwg.mxu0
    %2187 = vmatprep.subr.bf16.mxu0 %v1745
    %2188 = vmatpush1.bf16.msra.mxu0 %v1744
    %2189 = vmatprep.subr.bf16.mxu0 %v1749
    %2190 = vmatpush1.bf16.msra.mxu0 %v1748
    %2191 = vmatprep.subr.bf16.mxu0 %v1753
    %2192 = vmatpush1.bf16.msra.mxu0 %v1752
    %2193 = vmatprep.subr.bf16.mxu0 %v1757
    %2194 = vmatpush1.bf16.msra.mxu0 %v1756
    %2195 = vmatprep.subr.bf16.mxu0 %v1761
    %2196 = vmatpush1.bf16.msra.mxu0 %v1760
    %2197 = vmatprep.subr.bf16.mxu0 %v1765
    %2198 = vmatpush1.bf16.msra.mxu0 %v1764
    %2199 = vmatprep.subr.bf16.mxu0 %v1769
    %2200 = vmatpush1.bf16.msra.mxu0 %v1768
    %2201 = vmatprep.subr.bf16.mxu0 %v1773
    %2202 = vmatpush1.bf16.msra.mxu0 %v1772
    %2203 = vmatprep.subr.bf16.mxu0 %v1777
    %2204 = vmatpush1.bf16.msra.mxu0 %v1776
    %2205 = vmatprep.subr.bf16.mxu0 %v1781
    %2206 = vmatpush1.bf16.msra.mxu0 %v1780
    %2207 = vmatprep.subr.bf16.mxu0 %v1785
    %2208 = vmatpush1.bf16.msra.mxu0 %v1784
    %2209 = vmatprep.subr.bf16.mxu0 %v1789
    %2210 = vmatpush1.bf16.msra.mxu0 %v1788
    %2211 = vmatprep.subr.bf16.mxu0 %v1793
    %2212 = vmatpush1.bf16.msra.mxu0 %v1792
    %2213 = vmatprep.subr.bf16.mxu0 %v1797
    %2214 = vmatpush1.bf16.msra.mxu0 %v1796
    %2215 = vmatprep.subr.bf16.mxu0 %v1801
    %2216 = vmatpush1.bf16.msra.mxu0 %v1800
    %2217 = vmatprep.subr.bf16.mxu0 %v1805
    %2218 = vmatpush1.bf16.msra.mxu0 %v1804
    %2219 = vmatprep.mubr.bf16.mxu0 %v505
    %2220 = vmatmul.mubr.bf16.gmra.mrb[0].mxu0 %v504
    %v2221 = vpop.f32.mrb[0].mxu0
    %v2222 = vadd.f32 %v2181, %v2221
    %v2223 = vpop.f32.mrb[0].mxu0
    %v2224 = vadd.f32 %v2183, %v2223
    %v2225 = vpop.f32.mrb[0].mxu0
    %v2226 = vpop.f32.mrb[0].mxu0
    %2227 = vdwg.mxu0
    %2228 = vmatprep.subr.bf16.mxu0 %v1555
    %2229 = vmatpush1.bf16.msra.mxu0 %v1554
    %2230 = vmatprep.subr.bf16.mxu0 %v1559
    %2231 = vmatpush1.bf16.msra.mxu0 %v1558
    %2232 = vmatprep.subr.bf16.mxu0 %v1563
    %2233 = vmatpush1.bf16.msra.mxu0 %v1562
    %2234 = vmatprep.subr.bf16.mxu0 %v1567
    %2235 = vmatpush1.bf16.msra.mxu0 %v1566
    %2236 = vmatprep.subr.bf16.mxu0 %v1571
    %2237 = vmatpush1.bf16.msra.mxu0 %v1570
    %2238 = vmatprep.subr.bf16.mxu0 %v1575
    %2239 = vmatpush1.bf16.msra.mxu0 %v1574
    %2240 = vmatprep.subr.bf16.mxu0 %v1579
    %2241 = vmatpush1.bf16.msra.mxu0 %v1578
    %2242 = vmatprep.subr.bf16.mxu0 %v1583
    %2243 = vmatpush1.bf16.msra.mxu0 %v1582
    %2244 = vmatprep.subr.bf16.mxu0 %v1587
    %2245 = vmatpush1.bf16.msra.mxu0 %v1586
    %2246 = vmatprep.subr.bf16.mxu0 %v1591
    %2247 = vmatpush1.bf16.msra.mxu0 %v1590
    %2248 = vmatprep.subr.bf16.mxu0 %v1595
    %2249 = vmatpush1.bf16.msra.mxu0 %v1594
    %2250 = vmatprep.subr.bf16.mxu0 %v1599
    %2251 = vmatpush1.bf16.msra.mxu0 %v1598
    %2252 = vmatprep.subr.bf16.mxu0 %v1603
    %2253 = vmatpush1.bf16.msra.mxu0 %v1602
    %2254 = vmatprep.subr.bf16.mxu0 %v1607
    %2255 = vmatpush1.bf16.msra.mxu0 %v1606
    %2256 = vmatprep.subr.bf16.mxu0 %v1611
    %2257 = vmatpush1.bf16.msra.mxu0 %v1610
    %2258 = vmatprep.subr.bf16.mxu0 %v1615
    %2259 = vmatpush1.bf16.msra.mxu0 %v1614
    %2260 = vmatprep.mubr.bf16.mxu0 %v499
    %2261 = vmatmul.mubr.bf16.gmra.mrb[0].mxu0 %v498
    %v2262 = vpop.f32.mrb[0].mxu0
    %v2263 = vadd.f32 %v775, %v2262
    %v2264 = vpop.f32.mrb[0].mxu0
    %v2265 = vadd.f32 %v779, %v2264
    %v2266 = vpop.f32.mrb[0].mxu0
    %v2267 = vpop.f32.mrb[0].mxu0
    %2268 = vdwg.mxu0
    %2269 = vmatprep.subr.bf16.mxu0 %v1619
    %2270 = vmatpush1.bf16.msra.mxu0 %v1618
    %2271 = vmatprep.subr.bf16.mxu0 %v1623
    %2272 = vmatpush1.bf16.msra.mxu0 %v1622
    %2273 = vmatprep.subr.bf16.mxu0 %v1627
    %2274 = vmatpush1.bf16.msra.mxu0 %v1626
    %2275 = vmatprep.subr.bf16.mxu0 %v1631
    %2276 = vmatpush1.bf16.msra.mxu0 %v1630
    %2277 = vmatprep.subr.bf16.mxu0 %v1635
    %2278 = vmatpush1.bf16.msra.mxu0 %v1634
    %2279 = vmatprep.subr.bf16.mxu0 %v1639
    %2280 = vmatpush1.bf16.msra.mxu0 %v1638
    %2281 = vmatprep.subr.bf16.mxu0 %v1643
    %2282 = vmatpush1.bf16.msra.mxu0 %v1642
    %2283 = vmatprep.subr.bf16.mxu0 %v1647
    %2284 = vmatpush1.bf16.msra.mxu0 %v1646
    %2285 = vmatprep.subr.bf16.mxu0 %v1651
    %2286 = vmatpush1.bf16.msra.mxu0 %v1650
    %2287 = vmatprep.subr.bf16.mxu0 %v1655
    %2288 = vmatpush1.bf16.msra.mxu0 %v1654
    %2289 = vmatprep.subr.bf16.mxu0 %v1659
    %2290 = vmatpush1.bf16.msra.mxu0 %v1658
    %2291 = vmatprep.subr.bf16.mxu0 %v1663
    %2292 = vmatpush1.bf16.msra.mxu0 %v1662
    %2293 = vmatprep.subr.bf16.mxu0 %v1667
    %2294 = vmatpush1.bf16.msra.mxu0 %v1666
    %2295 = vmatprep.subr.bf16.mxu0 %v1671
    %2296 = vmatpush1.bf16.msra.mxu0 %v1670
    %2297 = vmatprep.subr.bf16.mxu0 %v1675
    %2298 = vmatpush1.bf16.msra.mxu0 %v1674
    %2299 = vmatprep.subr.bf16.mxu0 %v1679
    %2300 = vmatpush1.bf16.msra.mxu0 %v1678
    %2301 = vmatprep.mubr.bf16.mxu0 %v501
    %2302 = vmatmul.mubr.bf16.gmra.mrb[0].mxu0 %v500
    %v2303 = vpop.f32.mrb[0].mxu0
    %v2304 = vadd.f32 %v2263, %v2303
    %v2305 = vpop.f32.mrb[0].mxu0
    %v2306 = vadd.f32 %v2265, %v2305
    %v2307 = vpop.f32.mrb[0].mxu0
    %v2308 = vpop.f32.mrb[0].mxu0
    %2309 = vdwg.mxu0
    %2310 = vmatprep.subr.bf16.mxu0 %v1683
    %2311 = vmatpush1.bf16.msra.mxu0 %v1682
    %2312 = vmatprep.subr.bf16.mxu0 %v1687
    %2313 = vmatpush1.bf16.msra.mxu0 %v1686
    %2314 = vmatprep.subr.bf16.mxu0 %v1691
    %2315 = vmatpush1.bf16.msra.mxu0 %v1690
    %2316 = vmatprep.subr.bf16.mxu0 %v1695
    %2317 = vmatpush1.bf16.msra.mxu0 %v1694
    %2318 = vmatprep.subr.bf16.mxu0 %v1699
    %2319 = vmatpush1.bf16.msra.mxu0 %v1698
    %2320 = vmatprep.subr.bf16.mxu0 %v1703
    %2321 = vmatpush1.bf16.msra.mxu0 %v1702
    %2322 = vmatprep.subr.bf16.mxu0 %v1707
    %2323 = vmatpush1.bf16.msra.mxu0 %v1706
    %2324 = vmatprep.subr.bf16.mxu0 %v1711
    %2325 = vmatpush1.bf16.msra.mxu0 %v1710
    %2326 = vmatprep.subr.bf16.mxu0 %v1715
    %2327 = vmatpush1.bf16.msra.mxu0 %v1714
    %2328 = vmatprep.subr.bf16.mxu0 %v1719
    %2329 = vmatpush1.bf16.msra.mxu0 %v1718
    %2330 = vmatprep.subr.bf16.mxu0 %v1723
    %2331 = vmatpush1.bf16.msra.mxu0 %v1722
    %2332 = vmatprep.subr.bf16.mxu0 %v1727
    %2333 = vmatpush1.bf16.msra.mxu0 %v1726
    %2334 = vmatprep.subr.bf16.mxu0 %v1731
    %2335 = vmatpush1.bf16.msra.mxu0 %v1730
    %2336 = vmatprep.subr.bf16.mxu0 %v1735
    %2337 = vmatpush1.bf16.msra.mxu0 %v1734
    %2338 = vmatprep.subr.bf16.mxu0 %v1739
    %2339 = vmatpush1.bf16.msra.mxu0 %v1738
    %2340 = vmatprep.subr.bf16.mxu0 %v1743
    %2341 = vmatpush1.bf16.msra.mxu0 %v1742
    %2342 = vmatprep.mubr.bf16.mxu0 %v503
    %2343 = vmatmul.mubr.bf16.gmra.mrb[0].mxu0 %v502
    %v2344 = vpop.f32.mrb[0].mxu0
    %v2345 = vadd.f32 %v2304, %v2344
    %v2346 = vpop.f32.mrb[0].mxu0
    %v2347 = vadd.f32 %v2306, %v2346
    %v2348 = vpop.f32.mrb[0].mxu0
    %v2349 = vpop.f32.mrb[0].mxu0
    %2350 = vdwg.mxu0
    %2351 = vmatprep.subr.bf16.mxu0 %v1747
    %2352 = vmatpush1.bf16.msra.mxu0 %v1746
    %2353 = vmatprep.subr.bf16.mxu0 %v1751
    %2354 = vmatpush1.bf16.msra.mxu0 %v1750
    %2355 = vmatprep.subr.bf16.mxu0 %v1755
    %2356 = vmatpush1.bf16.msra.mxu0 %v1754
    %2357 = vmatprep.subr.bf16.mxu0 %v1759
    %2358 = vmatpush1.bf16.msra.mxu0 %v1758
    %2359 = vmatprep.subr.bf16.mxu0 %v1763
    %2360 = vmatpush1.bf16.msra.mxu0 %v1762
    %2361 = vmatprep.subr.bf16.mxu0 %v1767
    %2362 = vmatpush1.bf16.msra.mxu0 %v1766
    %2363 = vmatprep.subr.bf16.mxu0 %v1771
    %2364 = vmatpush1.bf16.msra.mxu0 %v1770
    %2365 = vmatprep.subr.bf16.mxu0 %v1775
    %2366 = vmatpush1.bf16.msra.mxu0 %v1774
    %2367 = vmatprep.subr.bf16.mxu0 %v1779
    %2368 = vmatpush1.bf16.msra.mxu0 %v1778
    %2369 = vmatprep.subr.bf16.mxu0 %v1783
    %2370 = vmatpush1.bf16.msra.mxu0 %v1782
    %2371 = vmatprep.subr.bf16.mxu0 %v1787
    %2372 = vmatpush1.bf16.msra.mxu0 %v1786
    %2373 = vmatprep.subr.bf16.mxu0 %v1791
    %2374 = vmatpush1.bf16.msra.mxu0 %v1790
    %2375 = vmatprep.subr.bf16.mxu0 %v1795
    %2376 = vmatpush1.bf16.msra.mxu0 %v1794
    %2377 = vmatprep.subr.bf16.mxu0 %v1799
    %2378 = vmatpush1.bf16.msra.mxu0 %v1798
    %2379 = vmatprep.subr.bf16.mxu0 %v1803
    %2380 = vmatpush1.bf16.msra.mxu0 %v1802
    %2381 = vmatprep.subr.bf16.mxu0 %v1807
    %2382 = vmatpush1.bf16.msra.mxu0 %v1806
    %2383 = vmatprep.mubr.bf16.mxu0 %v505
    %2384 = vmatmul.mubr.bf16.gmra.mrb[0].mxu0 %v504
    %v2385 = vpop.f32.mrb[0].mxu0
    %v2386 = vadd.f32 %v2345, %v2385
    %v2387 = vpop.f32.mrb[0].mxu0
    %v2388 = vadd.f32 %v2347, %v2387
    %v2389 = vpop.f32.mrb[0].mxu0
    %v2390 = vpop.f32.mrb[0].mxu0
    %2391 = vdwg.mxu0
    %v2392 = vmax.f32 %v2222, 0.0
    %v2393 = vmax.f32 %v2224, 0.0
    %v2394 = vmax.f32 %v2386, 0.0
    %v2395 = vmax.f32 %v2388, 0.0
    %v2396 = vpack.c.bf16 %v2392, %v2392
    %v2397 = vpack.c.bf16 %v2393, %v2393
    %v2398 = vpack.c.bf16 %v2394, %v2394
    %v2399 = vpack.c.bf16 %v2395, %v2395
    %v2400 = vld [vmem:[%s7] sm:$0xf]
    %v2401 = vld [vmem:[%s7 + $0x4] sm:$0xf]
    %v2402 = vld [vmem:[%s7 + $0x8] sm:$0xf]
    %v2403 = vld [vmem:[%s7 + $0xc] sm:$0xf]
    %v2404 = vld [vmem:[%s7 + $0x10] sm:$0xf]
    %v2405 = vld [vmem:[%s7 + $0x14] sm:$0xf]
    %v2406 = vld [vmem:[%s7 + $0x18] sm:$0xf]
    %v2407 = vld [vmem:[%s7 + $0x1c] sm:$0xf]
    %v2408 = vld [vmem:[%s7 + $0x20] sm:$0xf]
    %v2409 = vld [vmem:[%s7 + $0x24] sm:$0xf]
    %v2410 = vld [vmem:[%s7 + $0x28] sm:$0xf]
    %v2411 = vld [vmem:[%s7 + $0x2c] sm:$0xf]
    %v2412 = vld [vmem:[%s7 + $0x30] sm:$0xf]
    %v2413 = vld [vmem:[%s7 + $0x34] sm:$0xf]
    %v2414 = vld [vmem:[%s7 + $0x38] sm:$0xf]
    %v2415 = vld [vmem:[%s7 + $0x3c] sm:$0xf]
    %v2416 = vld [vmem:[%s7 + $0x40] sm:$0xf]
    %v2417 = vld [vmem:[%s7 + $0x44] sm:$0xf]
    %v2418 = vld [vmem:[%s7 + $0x48] sm:$0xf]
    %v2419 = vld [vmem:[%s7 + $0x4c] sm:$0xf]
    %v2420 = vld [vmem:[%s7 + $0x50] sm:$0xf]
    %v2421 = vld [vmem:[%s7 + $0x54] sm:$0xf]
    %v2422 = vld [vmem:[%s7 + $0x58] sm:$0xf]
    %v2423 = vld [vmem:[%s7 + $0x5c] sm:$0xf]
    %v2424 = vld [vmem:[%s7 + $0x60] sm:$0xf]
    %v2425 = vld [vmem:[%s7 + $0x64] sm:$0xf]
    %v2426 = vld [vmem:[%s7 + $0x68] sm:$0xf]
    %v2427 = vld [vmem:[%s7 + $0x6c] sm:$0xf]
    %v2428 = vld [vmem:[%s7 + $0x70] sm:$0xf]
    %v2429 = vld [vmem:[%s7 + $0x74] sm:$0xf]
    %v2430 = vld [vmem:[%s7 + $0x78] sm:$0xf]
    %v2431 = vld [vmem:[%s7 + $0x7c] sm:$0xf]
    %v2432 = vld [vmem:[%s7 + $0x80] sm:$0xf]
    %v2433 = vld [vmem:[%s7 + $0x84] sm:$0xf]
    %v2434 = vld [vmem:[%s7 + $0x88] sm:$0xf]
    %v2435 = vld [vmem:[%s7 + $0x8c] sm:$0xf]
    %v2436 = vld [vmem:[%s7 + $0x90] sm:$0xf]
    %v2437 = vld [vmem:[%s7 + $0x94] sm:$0xf]
    %v2438 = vld [vmem:[%s7 + $0x98] sm:$0xf]
    %v2439 = vld [vmem:[%s7 + $0x9c] sm:$0xf]
    %v2440 = vld [vmem:[%s7 + $0xa0] sm:$0xf]
    %v2441 = vld [vmem:[%s7 + $0xa4] sm:$0xf]
    %v2442 = vld [vmem:[%s7 + $0xa8] sm:$0xf]
    %v2443 = vld [vmem:[%s7 + $0xac] sm:$0xf]
    %v2444 = vld [vmem:[%s7 + $0xb0] sm:$0xf]
    %v2445 = vld [vmem:[%s7 + $0xb4] sm:$0xf]
    %v2446 = vld [vmem:[%s7 + $0xb8] sm:$0xf]
    %v2447 = vld [vmem:[%s7 + $0xbc] sm:$0xf]
    %v2448 = vld [vmem:[%s7 + $0xc0] sm:$0xf]
    %v2449 = vld [vmem:[%s7 + $0xc4] sm:$0xf]
    %v2450 = vld [vmem:[%s7 + $0xc8] sm:$0xf]
    %v2451 = vld [vmem:[%s7 + $0xcc] sm:$0xf]
    %v2452 = vld [vmem:[%s7 + $0xd0] sm:$0xf]
    %v2453 = vld [vmem:[%s7 + $0xd4] sm:$0xf]
    %v2454 = vld [vmem:[%s7 + $0xd8] sm:$0xf]
    %v2455 = vld [vmem:[%s7 + $0xdc] sm:$0xf]
    %v2456 = vld [vmem:[%s7 + $0xe0] sm:$0xf]
    %v2457 = vld [vmem:[%s7 + $0xe4] sm:$0xf]
    %v2458 = vld [vmem:[%s7 + $0xe8] sm:$0xf]
    %v2459 = vld [vmem:[%s7 + $0xec] sm:$0xf]
    %v2460 = vld [vmem:[%s7 + $0xf0] sm:$0xf]
    %v2461 = vld [vmem:[%s7 + $0xf4] sm:$0xf]
    %v2462 = vld [vmem:[%s7 + $0xf8] sm:$0xf]
    %v2463 = vld [vmem:[%s7 + $0xfc] sm:$0xf]
    %v2464 = vld [vmem:[%s8] sm:$0x1]
    %v2466 = vlaneseq
    %v2467 = vshrl.u32 %v2466, 7
    %v2468 = vsub.s32 0, %v2467
    %v2469 = vrot.slane %v2464, %v2468
    %v2535 = vunpack.c.l.b16 %v2400
    %v2536 = vunpack.c.l.b16 %v2401
    %v2537 = vunpack.c.l.b16 %v2402
    %v2538 = vunpack.c.l.b16 %v2403
    %v2539 = vunpack.c.l.b16 %v2404
    %v2540 = vunpack.c.l.b16 %v2405
    %v2541 = vunpack.c.l.b16 %v2406
    %v2542 = vunpack.c.l.b16 %v2407
    %v2543 = vunpack.c.l.b16 %v2408
    %v2544 = vunpack.c.l.b16 %v2409
    %v2545 = vunpack.c.l.b16 %v2410
    %v2546 = vunpack.c.l.b16 %v2411
    %v2547 = vunpack.c.l.b16 %v2412
    %v2548 = vunpack.c.l.b16 %v2413
    %v2549 = vunpack.c.l.b16 %v2414
    %v2550 = vunpack.c.l.b16 %v2415
    %v2551 = vunpack.c.l.b16 %v2416
    %v2552 = vunpack.c.l.b16 %v2417
    %v2553 = vunpack.c.l.b16 %v2418
    %v2554 = vunpack.c.l.b16 %v2419
    %v2555 = vunpack.c.l.b16 %v2420
    %v2556 = vunpack.c.l.b16 %v2421
    %v2557 = vunpack.c.l.b16 %v2422
    %v2558 = vunpack.c.l.b16 %v2423
    %v2559 = vunpack.c.l.b16 %v2424
    %v2560 = vunpack.c.l.b16 %v2425
    %v2561 = vunpack.c.l.b16 %v2426
    %v2562 = vunpack.c.l.b16 %v2427
    %v2563 = vunpack.c.l.b16 %v2428
    %v2564 = vunpack.c.l.b16 %v2429
    %v2565 = vunpack.c.l.b16 %v2430
    %v2566 = vunpack.c.l.b16 %v2431
    %v2567 = vunpack.c.l.b16 %v2432
    %v2568 = vunpack.c.l.b16 %v2433
    %v2569 = vunpack.c.l.b16 %v2434
    %v2570 = vunpack.c.l.b16 %v2435
    %v2571 = vunpack.c.l.b16 %v2436
    %v2572 = vunpack.c.l.b16 %v2437
    %v2573 = vunpack.c.l.b16 %v2438
    %v2574 = vunpack.c.l.b16 %v2439
    %v2575 = vunpack.c.l.b16 %v2440
    %v2576 = vunpack.c.l.b16 %v2441
    %v2577 = vunpack.c.l.b16 %v2442
    %v2578 = vunpack.c.l.b16 %v2443
    %v2579 = vunpack.c.l.b16 %v2444
    %v2580 = vunpack.c.l.b16 %v2445
    %v2581 = vunpack.c.l.b16 %v2446
    %v2582 = vunpack.c.l.b16 %v2447
    %v2583 = vunpack.c.l.b16 %v2448
    %v2584 = vunpack.c.l.b16 %v2449
    %v2585 = vunpack.c.l.b16 %v2450
    %v2586 = vunpack.c.l.b16 %v2451
    %v2587 = vunpack.c.l.b16 %v2452
    %v2588 = vunpack.c.l.b16 %v2453
    %v2589 = vunpack.c.l.b16 %v2454
    %v2590 = vunpack.c.l.b16 %v2455
    %v2591 = vunpack.c.l.b16 %v2456
    %v2592 = vunpack.c.l.b16 %v2457
    %v2593 = vunpack.c.l.b16 %v2458
    %v2594 = vunpack.c.l.b16 %v2459
    %v2595 = vunpack.c.l.b16 %v2460
    %v2596 = vunpack.c.l.b16 %v2461
    %v2597 = vunpack.c.l.b16 %v2462
    %v2598 = vunpack.c.l.b16 %v2463
    %v2599 = vpack.c.b16 %v2536, %v2535
    %v2600 = vpack.c.b16 %v2538, %v2537
    %v2601 = vpack.c.b16 %v2540, %v2539
    %v2602 = vpack.c.b16 %v2542, %v2541
    %v2603 = vpack.c.b16 %v2544, %v2543
    %v2604 = vpack.c.b16 %v2546, %v2545
    %v2605 = vpack.c.b16 %v2548, %v2547
    %v2606 = vpack.c.b16 %v2550, %v2549
    %v2607 = vpack.c.b16 %v2552, %v2551
    %v2608 = vpack.c.b16 %v2554, %v2553
    %v2609 = vpack.c.b16 %v2556, %v2555
    %v2610 = vpack.c.b16 %v2558, %v2557
    %v2611 = vpack.c.b16 %v2560, %v2559
    %v2612 = vpack.c.b16 %v2562, %v2561
    %v2613 = vpack.c.b16 %v2564, %v2563
    %v2614 = vpack.c.b16 %v2566, %v2565
    %v2615 = vpack.c.b16 %v2568, %v2567
    %v2616 = vpack.c.b16 %v2570, %v2569
    %v2617 = vpack.c.b16 %v2572, %v2571
    %v2618 = vpack.c.b16 %v2574, %v2573
    %v2619 = vpack.c.b16 %v2576, %v2575
    %v2620 = vpack.c.b16 %v2578, %v2577
    %v2621 = vpack.c.b16 %v2580, %v2579
    %v2622 = vpack.c.b16 %v2582, %v2581
    %v2623 = vpack.c.b16 %v2584, %v2583
    %v2624 = vpack.c.b16 %v2586, %v2585
    %v2625 = vpack.c.b16 %v2588, %v2587
    %v2626 = vpack.c.b16 %v2590, %v2589
    %v2627 = vpack.c.b16 %v2592, %v2591
    %v2628 = vpack.c.b16 %v2594, %v2593
    %v2629 = vpack.c.b16 %v2596, %v2595
    %v2630 = vpack.c.b16 %v2598, %v2597
    %2663 = vmatprep.subr.bf16.mxu0 0
    %2664 = vmatpush1.bf16.msra.mxu0 %v2599
    %2665 = vmatprep.subr.bf16.mxu0 0
    %2666 = vmatpush1.bf16.msra.mxu0 %v2600
    %2667 = vmatprep.subr.bf16.mxu0 0
    %2668 = vmatpush1.bf16.msra.mxu0 %v2601
    %2669 = vmatprep.subr.bf16.mxu0 0
    %2670 = vmatpush1.bf16.msra.mxu0 %v2602
    %2671 = vmatprep.subr.bf16.mxu0 0
    %2672 = vmatpush1.bf16.msra.mxu0 %v2603
    %2673 = vmatprep.subr.bf16.mxu0 0
    %2674 = vmatpush1.bf16.msra.mxu0 %v2604
    %2675 = vmatprep.subr.bf16.mxu0 0
    %2676 = vmatpush1.bf16.msra.mxu0 %v2605
    %2677 = vmatprep.subr.bf16.mxu0 0
    %2678 = vmatpush1.bf16.msra.mxu0 %v2606
    %2679 = vmatprep.subr.bf16.mxu0 0
    %2680 = vmatpush1.bf16.msra.mxu0 %v2607
    %2681 = vmatprep.subr.bf16.mxu0 0
    %2682 = vmatpush1.bf16.msra.mxu0 %v2608
    %2683 = vmatprep.subr.bf16.mxu0 0
    %2684 = vmatpush1.bf16.msra.mxu0 %v2609
    %2685 = vmatprep.subr.bf16.mxu0 0
    %2686 = vmatpush1.bf16.msra.mxu0 %v2610
    %2687 = vmatprep.subr.bf16.mxu0 0
    %2688 = vmatpush1.bf16.msra.mxu0 %v2611
    %2689 = vmatprep.subr.bf16.mxu0 0
    %2690 = vmatpush1.bf16.msra.mxu0 %v2612
    %2691 = vmatprep.subr.bf16.mxu0 0
    %2692 = vmatpush1.bf16.msra.mxu0 %v2613
    %2693 = vmatprep.subr.bf16.mxu0 0
    %2694 = vmatpush1.bf16.msra.mxu0 %v2614
    %2695 = vmatprep.mubr.bf16.mxu0 %v2397
    %2696 = vmatmul.mubr.bf16.gmra.mrb[0].mxu0 %v2396
    %v2697 = vpop.f32.mrb[0].mxu0
    %v2698 = vadd.f32 %v2469, %v2697
    %v2699 = vpop.f32.mrb[0].mxu0
    %v2700 = vpop.f32.mrb[0].mxu0
    %v2701 = vpop.f32.mrb[0].mxu0
    %2702 = vdwg.mxu0
    %2703 = vmatprep.subr.bf16.mxu0 0
    %2704 = vmatpush1.bf16.msra.mxu0 %v2615
    %2705 = vmatprep.subr.bf16.mxu0 0
    %2706 = vmatpush1.bf16.msra.mxu0 %v2616
    %2707 = vmatprep.subr.bf16.mxu0 0
    %2708 = vmatpush1.bf16.msra.mxu0 %v2617
    %2709 = vmatprep.subr.bf16.mxu0 0
    %2710 = vmatpush1.bf16.msra.mxu0 %v2618
    %2711 = vmatprep.subr.bf16.mxu0 0
    %2712 = vmatpush1.bf16.msra.mxu0 %v2619
    %2713 = vmatprep.subr.bf16.mxu0 0
    %2714 = vmatpush1.bf16.msra.mxu0 %v2620
    %2715 = vmatprep.subr.bf16.mxu0 0
    %2716 = vmatpush1.bf16.msra.mxu0 %v2621
    %2717 = vmatprep.subr.bf16.mxu0 0
    %2718 = vmatpush1.bf16.msra.mxu0 %v2622
    %2719 = vmatprep.subr.bf16.mxu0 0
    %2720 = vmatpush1.bf16.msra.mxu0 %v2623
    %2721 = vmatprep.subr.bf16.mxu0 0
    %2722 = vmatpush1.bf16.msra.mxu0 %v2624
    %2723 = vmatprep.subr.bf16.mxu0 0
    %2724 = vmatpush1.bf16.msra.mxu0 %v2625
    %2725 = vmatprep.subr.bf16.mxu0 0
    %2726 = vmatpush1.bf16.msra.mxu0 %v2626
    %2727 = vmatprep.subr.bf16.mxu0 0
    %2728 = vmatpush1.bf16.msra.mxu0 %v2627
    %2729 = vmatprep.subr.bf16.mxu0 0
    %2730 = vmatpush1.bf16.msra.mxu0 %v2628
    %2731 = vmatprep.subr.bf16.mxu0 0
    %2732 = vmatpush1.bf16.msra.mxu0 %v2629
    %2733 = vmatprep.subr.bf16.mxu0 0
    %2734 = vmatpush1.bf16.msra.mxu0 %v2630
    %2735 = vmatprep.mubr.bf16.mxu0 %v2399
    %2736 = vmatmul.mubr.bf16.gmra.mrb[0].mxu0 %v2398
    %v2737 = vpop.f32.mrb[0].mxu0
    %v2738 = vadd.f32 %v2698, %v2737
    %v2739 = vpop.f32.mrb[0].mxu0
    %v2740 = vpop.f32.mrb[0].mxu0
    %v2741 = vpop.f32.mrb[0].mxu0
    %2742 = vdwg.mxu0
    %2743 = vst.msk [vmem:[#allocation5] sm:$0xff] %vm49, %v2738
    // Predicated region
    $region42: #{matching_dense.1} parent=1 // pred_check
      _
    $region43: #{matching_dense.1} parent=1 // pred_check_branch
      %2745 = sbr.rel (0) target = $region45
    $region44: #{matching_dense.1} parent=1 // pred_region
      %s2747 = ssub.s32 128, 128
      %2748 = vsyncadd [#allocation4], %s2747
      %s2750 = sshll.u32 [#allocation5], 4
      %s2751 = int_to_ptr.vmem [resolvable:$true] %s2750
      %2753 = dma.vmem_to_hbm [thread:$0]  %s2751, 128, %s9, [#allocation4]
    $region45: #{matching_dense.1} parent=1 // pred_fallthru
      _
    // Predicated region
    $region46: #{matching_dense.1} parent=1 // pred_check
      _
    $region47: #{matching_dense.1} parent=1 // pred_check_branch
      %2755 = sbr.rel (0) target = $region49
    $region48: #{matching_dense.1} parent=1 // pred_region
      %2756 = dma.done [#allocation4], 128
    $region49: #{matching_dense.1} parent=1 // pred_fallthru
      _
    %2757 = vsyncpa [#allocation3], 1
    %2758 = vsyncpa [#allocation4], 1

</llo_original>
